<compile_context>
chip_gen: v7x
topology: tpu7x:2x2x1
jax: 0.10.0
libtpu: 0.0.40
codegen_flags: <defaults>
</compile_context>

<pallas_src>
import functools

import jax
import jax.numpy as jnp
from jax.experimental import pallas as pl
from jax.experimental.pallas import tpu as pltpu


def _round_up(x, m):
    return ((x + m - 1) // m) * m


def _apply_output_activation(h, name):
    if name == "linear":
        return h
    if name == "relu":
        return jnp.maximum(h, 0.0)
    if name == "sigmoid":
        return jax.nn.sigmoid(h)
    if name == "tanh":
        return jnp.tanh(h)
    if name == "softmax":
        return jax.nn.softmax(h, axis=-1)
    raise ValueError(f"unknown output activation: {name}")


def _make_mlp_kernel(num_layers, output_bias, output_activation):
    """Builds a kernel closed over the (static) layer structure."""

    def kernel(*refs):
        x_ref = refs[0]
        o_ref = refs[-1]
        param_refs = refs[1:-1]

        h = x_ref[...]  # native dtype; no blanket f32 upcast of MXU operands
        idx = 0
        for i in range(num_layers):
            w = param_refs[idx][...]
            idx += 1
            if h.dtype != w.dtype:
                h = h.astype(w.dtype)  # feed the MXU in the parameter dtype
            # f32 accumulation on the MXU.
            h = jnp.dot(h, w, preferred_element_type=jnp.float32)
            if (i < num_layers - 1) or output_bias:
                b = param_refs[idx][...]  # (1, n) -> broadcasts over tokens
                idx += 1
                h = h + b.astype(jnp.float32)  # epilogue stays f32 (v5e-safe)
            if i < num_layers - 1:
                h = jnp.maximum(h, 0.0)  # hidden_activation = ReLU

        h = _apply_output_activation(h, output_activation)
        o_ref[...] = h.astype(o_ref.dtype)

    return kernel


def init_mlp_head_params(key, in_size, hidden_size, num_layers, num_outputs,
                         output_bias, dtype=jnp.float32):
    """Deterministic synthetic params. Weights stored as (in, out)."""
    params = []  # flat list: w0, b0, w1, b1, ..., w_last[, b_last]
    if num_layers == 1:
        sizes = [(in_size, num_outputs)]
    else:
        sizes = [(in_size, hidden_size)]
        sizes += [(hidden_size, hidden_size)] * (num_layers - 2)
        sizes += [(hidden_size, num_outputs)]
    for i, (fin, fout) in enumerate(sizes):
        key, kw, kb = jax.random.split(key, 3)
        scale = 1.0 / jnp.sqrt(jnp.float32(fin))
        w = (jax.random.uniform(kw, (fin, fout), jnp.float32, -1.0, 1.0) * scale
             ).astype(dtype)
        params.append(w)
        if (i < num_layers - 1) or output_bias:
            b = (jax.random.uniform(kb, (1, fout), jnp.float32, -1.0, 1.0) * scale
                 ).astype(dtype)
            params.append(b)
    return params


@functools.partial(jax.jit, static_argnames=(
    "num_layers", "output_bias", "output_activation", "tm"))
def mlp_head_forward(x, params, *, num_layers, output_bias,
                     output_activation, tm=256):
    """x: [tokens, in_size] -> [tokens, num_outputs]."""
    assert tm % 8 == 0, "tm must be a multiple of 8 (sublane alignment)"
    tokens, in_size = x.shape
    last_w = params[-2] if output_bias else params[-1]
    num_outputs = last_w.shape[-1]

    # Token tile: tuned default, clamped so tiny inputs stay a single dense
    # tile.  The grid handles a ragged last block (no HBM padding pass).
    tm_eff = min(tm, _round_up(tokens, 8))
    grid = (pl.cdiv(tokens, tm_eff),)

    kernel = _make_mlp_kernel(num_layers, output_bias, output_activation)

    # x / output blocks cover the full feature dim (== array dim, so exempt
    # from the 128-lane divisibility rule); weights/biases use a constant
    # index_map so the pipeline DMAs them once and keeps them VMEM-resident.
    in_specs = [pl.BlockSpec((tm_eff, in_size), lambda i: (i, 0))]
    for p in params:
        in_specs.append(pl.BlockSpec(p.shape, lambda i: (0, 0)))
    out_spec = pl.BlockSpec((tm_eff, num_outputs), lambda i: (i, 0))

    # Advisory cost estimate so XLA schedules surrounding ops sensibly.
    weight_dims = []
    idx = 0
    for i in range(num_layers):
        weight_dims.append(params[idx].shape)
        idx += 1
        if (i < num_layers - 1) or output_bias:
            idx += 1
    flops = 2 * tokens * sum(fi * fo for fi, fo in weight_dims)
    transcendentals = (tokens * num_outputs
                       if output_activation in ("sigmoid", "tanh", "softmax")
                       else 0)
    param_bytes = sum(int(p.size) * p.dtype.itemsize for p in params)
    bytes_accessed = (int(x.size) * x.dtype.itemsize + param_bytes
                      + tokens * num_outputs * x.dtype.itemsize)
    cost = pl.CostEstimate(flops=int(flops),
                           transcendentals=int(transcendentals),
                           bytes_accessed=int(bytes_accessed))

    # Explicit VMEM budget: double-buffered activation/output blocks, (double-
    # buffered) params, plus f32 intermediates.  Clamp below v7x's 64 MiB.
    max_width = max([in_size, num_outputs] + [fo for _, fo in weight_dims])
    act_bytes = 2 * tm_eff * (in_size + num_outputs) * x.dtype.itemsize
    scratch_bytes = 4 * tm_eff * max_width * 4
    vmem_needed = 2 * param_bytes + act_bytes + scratch_bytes
    vmem_limit = int(min(max(vmem_needed + (8 << 20), 32 << 20), 56 << 20))

    out = pl.pallas_call(
        kernel,
        out_shape=jax.ShapeDtypeStruct((tokens, num_outputs), x.dtype),
        grid_spec=pltpu.PrefetchScalarGridSpec(
            num_scalar_prefetch=0,
            grid=grid,
            in_specs=in_specs,
            out_specs=out_spec,
        ),
        compiler_params=pltpu.CompilerParams(
            dimension_semantics=("parallel",),
            vmem_limit_bytes=vmem_limit,
        ),
        cost_estimate=cost,
    )(x, *params)

    return out


def mlp_head_reference(x, params, *, num_layers, output_bias,
                       output_activation):
    h = x.astype(jnp.float32)
    idx = 0
    for i in range(num_layers):
        w = params[idx].astype(jnp.float32)
        idx += 1
        h = h @ w
        if (i < num_layers - 1) or output_bias:
            h = h + params[idx].astype(jnp.float32)
            idx += 1
        if i < num_layers - 1:
            h = jnp.maximum(h, 0.0)
    return _apply_output_activation(h, output_activation).astype(x.dtype)


if __name__ == "__main__":
    key = jax.random.PRNGKey(0)
    kx, kp1, kp2 = jax.random.split(key, 3)

    # Config 1: MLPHead defaults (num_outputs=1, output_bias=False, sigmoid).
    # batch*seq = 512 tokens -> 2 grid steps at tm=256 (both v7x TCs busy).
    batch, seq = 2, 256
    in_size, hidden_size, num_layers = 64, 64, 3
    num_outputs, output_bias = 1, False
    output_activation = "sigmoid"

    x = jax.random.normal(kx, (batch, seq, in_size), dtype=jnp.float32)
    x2d = x.reshape(batch * seq, in_size)

    params = init_mlp_head_params(kp1, in_size, hidden_size, num_layers,
                                  num_outputs, output_bias)

    out2d = mlp_head_forward(
        x2d, params,
        num_layers=num_layers,
        output_bias=output_bias,
        output_activation=output_activation,
    )
    out = out2d.reshape(batch, seq, num_outputs)
    jax.block_until_ready(out)

    ref = mlp_head_reference(
        x2d, params,
        num_layers=num_layers,
        output_bias=output_bias,
        output_activation=output_activation,
    ).reshape(batch, seq, num_outputs)

    assert out.shape == (batch, seq, num_outputs)
    assert jnp.allclose(out, ref, atol=1e-4, rtol=1e-4)

    # Config 2: exercises output_bias=True and softmax over num_outputs=3.
    num_layers2, num_outputs2, output_bias2 = 2, 3, True
    params2 = init_mlp_head_params(kp2, in_size, hidden_size, num_layers2,
                                   num_outputs2, output_bias2)
    out2 = mlp_head_forward(
        x2d, params2,
        num_layers=num_layers2,
        output_bias=output_bias2,
        output_activation="softmax",
    )
    jax.block_until_ready(out2)
    ref2 = mlp_head_reference(
        x2d, params2,
        num_layers=num_layers2,
        output_bias=output_bias2,
        output_activation="softmax",
    )
    assert out2.shape == (batch * seq, num_outputs2)
    assert jnp.allclose(out2, ref2, atol=1e-4, rtol=1e-4)

    # Config 3: ragged token count (300 tokens, tm=256 -> 2 steps, last block
    # partial) to exercise the no-padding path with clamped OOB reads/writes.
    x3 = x2d[:300]
    out3 = mlp_head_forward(
        x3, params,
        num_layers=num_layers,
        output_bias=output_bias,
        output_activation=output_activation,
    )
    jax.block_until_ready(out3)
    ref3 = mlp_head_reference(
        x3, params,
        num_layers=num_layers,
        output_bias=output_bias,
        output_activation=output_activation,
    )
    assert out3.shape == (300, num_outputs)
    assert jnp.allclose(out3, ref3, atol=1e-4, rtol=1e-4)

    print("KERNEL_OK")
</pallas_src>

<mosaic_0001>
module attributes {stable_mosaic.version = 11 : i64} {
  func.func @kernel(%arg0: i32, %arg1: memref<256x64xf32, #tpu.memory_space<vmem>>, %arg2: memref<64x64xf32, #tpu.memory_space<vmem>>, %arg3: memref<1x64xf32, #tpu.memory_space<vmem>>, %arg4: memref<64x64xf32, #tpu.memory_space<vmem>>, %arg5: memref<1x64xf32, #tpu.memory_space<vmem>>, %arg6: memref<64x1xf32, #tpu.memory_space<vmem>>, %arg7: memref<256x1xf32, #tpu.memory_space<vmem>>) attributes {dimension_semantics = [#tpu.dimension_semantics<parallel>], iteration_bounds = array<i64: 2>, scalar_prefetch = 0 : i64, scratch_operands = 0 : i64, tpu.core_type = #tpu.core_type<tc>, window_params = [{transform_indices = @transform_0, window_bounds = array<i64: 256, 64>}, {pipeline_mode = #tpu.pipeline_mode<synchronous>, transform_indices = @transform_1, window_bounds = array<i64: 64, 64>}, {pipeline_mode = #tpu.pipeline_mode<synchronous>, transform_indices = @transform_2, window_bounds = array<i64: 1, 64>}, {pipeline_mode = #tpu.pipeline_mode<synchronous>, transform_indices = @transform_3, window_bounds = array<i64: 64, 64>}, {pipeline_mode = #tpu.pipeline_mode<synchronous>, transform_indices = @transform_4, window_bounds = array<i64: 1, 64>}, {pipeline_mode = #tpu.pipeline_mode<synchronous>, transform_indices = @transform_5, window_bounds = array<i64: 64, 1>}, {transform_indices = @transform_6, window_bounds = array<i64: 256, 1>}]} {
    %c0 = arith.constant 0 : index
    %c0_0 = arith.constant 0 : index
    %0 = vector.load %arg1[%c0, %c0_0] : memref<256x64xf32, #tpu.memory_space<vmem>>, vector<256x64xf32>
    %c0_1 = arith.constant 0 : index
    %c0_2 = arith.constant 0 : index
    %1 = vector.load %arg2[%c0_1, %c0_2] : memref<64x64xf32, #tpu.memory_space<vmem>>, vector<64x64xf32>
    %cst = arith.constant dense<0.000000e+00> : vector<256x64xf32>
    %2 = tpu.matmul %0, %1, %cst {dimension_numbers = #tpu.dot_dimension_numbers<[1], [0], [0], [1], [0, 0, 1, 1], [], []>} : vector<256x64xf32>, vector<64x64xf32>, vector<256x64xf32> -> vector<256x64xf32>
    %c0_3 = arith.constant 0 : index
    %c0_4 = arith.constant 0 : index
    %3 = vector.load %arg3[%c0_3, %c0_4] : memref<1x64xf32, #tpu.memory_space<vmem>>, vector<1x64xf32>
    %4 = vector.broadcast %3 : vector<1x64xf32> to vector<256x64xf32>
    %5 = arith.addf %2, %4 : vector<256x64xf32>
    %cst_5 = arith.constant 0.000000e+00 : f32
    %6 = vector.broadcast %cst_5 : f32 to vector<256x64xf32>
    %7 = arith.maximumf %5, %6 : vector<256x64xf32>
    %c0_6 = arith.constant 0 : index
    %c0_7 = arith.constant 0 : index
    %8 = vector.load %arg4[%c0_6, %c0_7] : memref<64x64xf32, #tpu.memory_space<vmem>>, vector<64x64xf32>
    %cst_8 = arith.constant dense<0.000000e+00> : vector<256x64xf32>
    %9 = tpu.matmul %7, %8, %cst_8 {dimension_numbers = #tpu.dot_dimension_numbers<[1], [0], [0], [1], [0, 0, 1, 1], [], []>} : vector<256x64xf32>, vector<64x64xf32>, vector<256x64xf32> -> vector<256x64xf32>
    %c0_9 = arith.constant 0 : index
    %c0_10 = arith.constant 0 : index
    %10 = vector.load %arg5[%c0_9, %c0_10] : memref<1x64xf32, #tpu.memory_space<vmem>>, vector<1x64xf32>
    %11 = vector.broadcast %10 : vector<1x64xf32> to vector<256x64xf32>
    %12 = arith.addf %9, %11 : vector<256x64xf32>
    %cst_11 = arith.constant 0.000000e+00 : f32
    %13 = vector.broadcast %cst_11 : f32 to vector<256x64xf32>
    %14 = arith.maximumf %12, %13 : vector<256x64xf32>
    %c0_12 = arith.constant 0 : index
    %c0_13 = arith.constant 0 : index
    %15 = vector.load %arg6[%c0_12, %c0_13] : memref<64x1xf32, #tpu.memory_space<vmem>>, vector<64x1xf32>
    %cst_14 = arith.constant dense<0.000000e+00> : vector<256x1xf32>
    %16 = tpu.matmul %14, %15, %cst_14 {dimension_numbers = #tpu.dot_dimension_numbers<[1], [0], [0], [1], [0, 0, 1, 1], [], []>} : vector<256x64xf32>, vector<64x1xf32>, vector<256x1xf32> -> vector<256x1xf32>
    %17 = arith.negf %16 : vector<256x1xf32>
    %18 = math.exp %17 : vector<256x1xf32>
    %cst_15 = arith.constant 1.000000e+00 : f32
    %19 = vector.broadcast %cst_15 : f32 to vector<256x1xf32>
    %20 = arith.addf %19, %18 : vector<256x1xf32>
    %21 = arith.divf %19, %20 : vector<256x1xf32>
    %c0_16 = arith.constant 0 : index
    %c0_17 = arith.constant 0 : index
    %22 = vector.load %arg7[%c0_16, %c0_17] : memref<256x1xf32, #tpu.memory_space<vmem>>, vector<256x1xf32>
    tpu.vector_store %arg7[%c0_16, %c0_17], %21 {strides = array<i32>} : memref<256x1xf32, #tpu.memory_space<vmem>>, vector<256x1xf32>,
    return
  }
  func.func @transform_0(%arg0: i32) -> (i32, i32) {
    %c0_i32 = arith.constant 0 : i32
    %c0_i32_0 = arith.constant 0 : i32
    return %arg0, %c0_i32 : i32, i32
  }
  func.func @transform_1(%arg0: i32) -> (i32, i32) {
    %c0_i32 = arith.constant 0 : i32
    %c0_i32_0 = arith.constant 0 : i32
    %c0_i32_1 = arith.constant 0 : i32
    return %c0_i32, %c0_i32_0 : i32, i32
  }
  func.func @transform_2(%arg0: i32) -> (i32, i32) {
    %c0_i32 = arith.constant 0 : i32
    %c0_i32_0 = arith.constant 0 : i32
    %c0_i32_1 = arith.constant 0 : i32
    return %c0_i32, %c0_i32_0 : i32, i32
  }
  func.func @transform_3(%arg0: i32) -> (i32, i32) {
    %c0_i32 = arith.constant 0 : i32
    %c0_i32_0 = arith.constant 0 : i32
    %c0_i32_1 = arith.constant 0 : i32
    return %c0_i32, %c0_i32_0 : i32, i32
  }
  func.func @transform_4(%arg0: i32) -> (i32, i32) {
    %c0_i32 = arith.constant 0 : i32
    %c0_i32_0 = arith.constant 0 : i32
    %c0_i32_1 = arith.constant 0 : i32
    return %c0_i32, %c0_i32_0 : i32, i32
  }
  func.func @transform_5(%arg0: i32) -> (i32, i32) {
    %c0_i32 = arith.constant 0 : i32
    %c0_i32_0 = arith.constant 0 : i32
    %c0_i32_1 = arith.constant 0 : i32
    return %c0_i32, %c0_i32_0 : i32, i32
  }
  func.func @transform_6(%arg0: i32) -> (i32, i32) {
    %c0_i32 = arith.constant 0 : i32
    %c0_i32_0 = arith.constant 0 : i32
    return %arg0, %c0_i32 : i32, i32
  }
}

</mosaic_0001>

<llo_original>
// kernel: mlp_head_forward.1
$region0: #{mlp_head_forward.1}
  #allocation0 [shape = 'u32[]', space=smem, size = 0x4, offset = 0x4, fixed_abs, tag = 'smem constant byte address 0x4 - core index']
  #allocation1 [shape = 'u32[144,128]{1,0:T(1,128)}', space=vmem, size = 0x12000, scoped, tag = 'internal scratch']
  %s0 = inlined_call_operand.vmem [shape: f32[512,64], index: 0, kind: input, shape index: {}]
  %s1 = inlined_call_operand.vmem [shape: f32[64,64], index: 1, kind: input, shape index: {}]
  %s2 = inlined_call_operand.vmem [shape: f32[1,64], index: 2, kind: input, shape index: {}]
  %s3 = inlined_call_operand.vmem [shape: f32[64,64], index: 3, kind: input, shape index: {}]
  %s4 = inlined_call_operand.vmem [shape: f32[1,64], index: 4, kind: input, shape index: {}]
  %s5 = inlined_call_operand.vmem [shape: f32[64,1], index: 5, kind: input, shape index: {}]
  %s6 = inlined_call_operand.vmem [shape: f32[512,1], index: 6, kind: output, shape index: {}]
  %s7 = sld [smem:[#allocation0]]
  $region57: #{mlp_head_forward.1} parent=0
    _
  %s9 = ssub.s32 1, %s7
  %s10 = scalar_select 0, %s9, %s7
  loop: start=0, step=1, limit=4
  $region2: #{mlp_head_forward.1} parent=0 // loop_pre_header
    _
  $region3: #{mlp_head_forward.1} parent=0 // loop_header
    %s12 = sphi 0, %s16
    %p13 = scmp.ge.s32.totalorder %s12, 4
    %s22 = sphi 0, %s24
    %s25 = sphi 0, %s22
    %s26 = sphi 0, %s25
    %s42 = sphi 0, %s26
    %s46 = sphi 0, %s46
    %s48 = sphi 0, %s46
    %s49 = sphi 0, %s48
    %s63 = sphi 0, %s49
    %s67 = sphi 0, %s67
    %s69 = sphi 0, %s67
    %s70 = sphi 0, %s69
    %s84 = sphi 0, %s70
    %s88 = sphi 0, %s88
    %s90 = sphi 0, %s88
    %s91 = sphi 0, %s90
    %s105 = sphi 0, %s91
    %s109 = sphi 0, %s109
    %s111 = sphi 0, %s109
    %s112 = sphi 0, %s111
    %s126 = sphi 0, %s112
    %s130 = sphi 0, %s130
    %s132 = sphi 0, %s130
    %s133 = sphi 0, %s132
    %s147 = sphi 0, %s133
    %s153 = sphi 0, %s155
    %s156 = sphi 0, %s153
    %s157 = sphi 0, %s156
    %s173 = sphi 0, %s157
  $region4: #{mlp_head_forward.1} parent=0 // loop_header_branch
    %15 = sbr.rel (%p13) target = $region8
  $region5: #{mlp_head_forward.1} parent=0 // loop_body
    %s17 = ssub.s32 %s12, 1
    %s18 = ssub.s32 %s12, 2
    %s19 = sadd.s32 %s12, 1
    %s20 = ssub.s32 %s12, %s19
    %p21 = scmp.eq.s32.totalorder %s20, 0
    %s23 = sadd.s32 %s22, 1
    %s24 = scalar_select %p21, %s22, %s23
    %p27 = pneg %p21
    %p28 = scmp.eq.s32.totalorder %s12, 1
    %p29 = por %p27, %p28
    %p30 = scmp.ne.s32.totalorder %s22, %s25
    %p31 = scmp.eq.s32.totalorder %s12, 0
    %p32 = por %p30, %p31
    %p33 = scmp.ne.s32.totalorder %s22, %s25
    %p34 = scmp.eq.s32.totalorder %s17, 1
    %p35 = por %p33, %p34
    %p36 = scmp.ne.s32.totalorder %s25, %s26
    %p37 = scmp.eq.s32.totalorder %s17, 0
    %p38 = por %p36, %p37
    %p39 = scmp.ne.s32.totalorder %s25, %s26
    %p40 = scmp.eq.s32.totalorder %s18, 1
    %p41 = por %p39, %p40
    %p43 = scmp.ne.s32.totalorder %s26, %s42
    %p44 = scmp.eq.s32.totalorder %s18, 0
    %p45 = por %p43, %p44
    %s47 = sadd.s32 %s46, 1
    %p50 = scmp.eq.s32.totalorder %s12, 1
    %p51 = scmp.ne.s32.totalorder %s46, %s48
    %p52 = scmp.eq.s32.totalorder %s12, 0
    %p53 = por %p51, %p52
    %p54 = scmp.ne.s32.totalorder %s46, %s48
    %p55 = scmp.eq.s32.totalorder %s17, 1
    %p56 = por %p54, %p55
    %p57 = scmp.ne.s32.totalorder %s48, %s49
    %p58 = scmp.eq.s32.totalorder %s17, 0
    %p59 = por %p57, %p58
    %p60 = scmp.ne.s32.totalorder %s48, %s49
    %p61 = scmp.eq.s32.totalorder %s18, 1
    %p62 = por %p60, %p61
    %p64 = scmp.ne.s32.totalorder %s49, %s63
    %p65 = scmp.eq.s32.totalorder %s18, 0
    %p66 = por %p64, %p65
    %s68 = sadd.s32 %s67, 1
    %p71 = scmp.eq.s32.totalorder %s12, 1
    %p72 = scmp.ne.s32.totalorder %s67, %s69
    %p73 = scmp.eq.s32.totalorder %s12, 0
    %p74 = por %p72, %p73
    %p75 = scmp.ne.s32.totalorder %s67, %s69
    %p76 = scmp.eq.s32.totalorder %s17, 1
    %p77 = por %p75, %p76
    %p78 = scmp.ne.s32.totalorder %s69, %s70
    %p79 = scmp.eq.s32.totalorder %s17, 0
    %p80 = por %p78, %p79
    %p81 = scmp.ne.s32.totalorder %s69, %s70
    %p82 = scmp.eq.s32.totalorder %s18, 1
    %p83 = por %p81, %p82
    %p85 = scmp.ne.s32.totalorder %s70, %s84
    %p86 = scmp.eq.s32.totalorder %s18, 0
    %p87 = por %p85, %p86
    %s89 = sadd.s32 %s88, 1
    %p92 = scmp.eq.s32.totalorder %s12, 1
    %p93 = scmp.ne.s32.totalorder %s88, %s90
    %p94 = scmp.eq.s32.totalorder %s12, 0
    %p95 = por %p93, %p94
    %p96 = scmp.ne.s32.totalorder %s88, %s90
    %p97 = scmp.eq.s32.totalorder %s17, 1
    %p98 = por %p96, %p97
    %p99 = scmp.ne.s32.totalorder %s90, %s91
    %p100 = scmp.eq.s32.totalorder %s17, 0
    %p101 = por %p99, %p100
    %p102 = scmp.ne.s32.totalorder %s90, %s91
    %p103 = scmp.eq.s32.totalorder %s18, 1
    %p104 = por %p102, %p103
    %p106 = scmp.ne.s32.totalorder %s91, %s105
    %p107 = scmp.eq.s32.totalorder %s18, 0
    %p108 = por %p106, %p107
    %s110 = sadd.s32 %s109, 1
    %p113 = scmp.eq.s32.totalorder %s12, 1
    %p114 = scmp.ne.s32.totalorder %s109, %s111
    %p115 = scmp.eq.s32.totalorder %s12, 0
    %p116 = por %p114, %p115
    %p117 = scmp.ne.s32.totalorder %s109, %s111
    %p118 = scmp.eq.s32.totalorder %s17, 1
    %p119 = por %p117, %p118
    %p120 = scmp.ne.s32.totalorder %s111, %s112
    %p121 = scmp.eq.s32.totalorder %s17, 0
    %p122 = por %p120, %p121
    %p123 = scmp.ne.s32.totalorder %s111, %s112
    %p124 = scmp.eq.s32.totalorder %s18, 1
    %p125 = por %p123, %p124
    %p127 = scmp.ne.s32.totalorder %s112, %s126
    %p128 = scmp.eq.s32.totalorder %s18, 0
    %p129 = por %p127, %p128
    %s131 = sadd.s32 %s130, 1
    %p134 = scmp.eq.s32.totalorder %s12, 1
    %p135 = scmp.ne.s32.totalorder %s130, %s132
    %p136 = scmp.eq.s32.totalorder %s12, 0
    %p137 = por %p135, %p136
    %p138 = scmp.ne.s32.totalorder %s130, %s132
    %p139 = scmp.eq.s32.totalorder %s17, 1
    %p140 = por %p138, %p139
    %p141 = scmp.ne.s32.totalorder %s132, %s133
    %p142 = scmp.eq.s32.totalorder %s17, 0
    %p143 = por %p141, %p142
    %p144 = scmp.ne.s32.totalorder %s132, %s133
    %p145 = scmp.eq.s32.totalorder %s18, 1
    %p146 = por %p144, %p145
    %p148 = scmp.ne.s32.totalorder %s133, %s147
    %p149 = scmp.eq.s32.totalorder %s18, 0
    %p150 = por %p148, %p149
    %s151 = ssub.s32 %s12, %s19
    %p152 = scmp.eq.s32.totalorder %s151, 0
    %s154 = sadd.s32 %s153, 1
    %s155 = scalar_select %p152, %s153, %s154
    %p158 = pneg %p152
    %p159 = scmp.eq.s32.totalorder %s12, 1
    %p160 = por %p158, %p159
    %p161 = scmp.ne.s32.totalorder %s153, %s156
    %p162 = scmp.eq.s32.totalorder %s12, 0
    %p163 = por %p161, %p162
    %p164 = scmp.ne.s32.totalorder %s153, %s156
    %p165 = scmp.eq.s32.totalorder %s17, 1
    %p166 = por %p164, %p165
    %p167 = scmp.ne.s32.totalorder %s156, %s157
    %p168 = scmp.eq.s32.totalorder %s17, 0
    %p169 = por %p167, %p168
    %p170 = scmp.ne.s32.totalorder %s156, %s157
    %p171 = scmp.eq.s32.totalorder %s18, 1
    %p172 = por %p170, %p171
    %p174 = scmp.ne.s32.totalorder %s157, %s173
    %p175 = scmp.eq.s32.totalorder %s18, 0
    %p176 = por %p174, %p175
    %p177 = scmp.le.s32.totalorder 1, %s12
    %p178 = scmp.lt.s32.totalorder %s12, 3
    %p179 = pnand %p177, %p178
    %p180 = pneg %p179
    // Predicated region
    $region9: #{mlp_head_forward.1} parent=5 // pred_check
      _
    $region10: #{mlp_head_forward.1} parent=5 // pred_check_branch
      %182 = sbr.rel (%p179) target = $region12
    $region11: #{mlp_head_forward.1} parent=5 // pred_region
      %s183 = ssub.s32 %s12, 1
      // Predicated region
      $region13: #{mlp_head_forward.1} parent=11 // pred_check
        %p184 = pneg %p59
      $region14: #{mlp_head_forward.1} parent=11 // pred_check_branch
        %186 = sbr.rel (%p184) target = $region16
      $region15: #{mlp_head_forward.1} parent=11 // pred_region
        _
      $region16: #{mlp_head_forward.1} parent=11 // pred_fallthru
        _
      // Predicated region
      $region17: #{mlp_head_forward.1} parent=11 // pred_check
        %p187 = pneg %p80
      $region18: #{mlp_head_forward.1} parent=11 // pred_check_branch
        %189 = sbr.rel (%p187) target = $region20
      $region19: #{mlp_head_forward.1} parent=11 // pred_region
        _
      $region20: #{mlp_head_forward.1} parent=11 // pred_fallthru
        _
      // Predicated region
      $region21: #{mlp_head_forward.1} parent=11 // pred_check
        %p190 = pneg %p101
      $region22: #{mlp_head_forward.1} parent=11 // pred_check_branch
        %192 = sbr.rel (%p190) target = $region24
      $region23: #{mlp_head_forward.1} parent=11 // pred_region
        _
      $region24: #{mlp_head_forward.1} parent=11 // pred_fallthru
        _
      // Predicated region
      $region25: #{mlp_head_forward.1} parent=11 // pred_check
        %p193 = pneg %p122
      $region26: #{mlp_head_forward.1} parent=11 // pred_check_branch
        %195 = sbr.rel (%p193) target = $region28
      $region27: #{mlp_head_forward.1} parent=11 // pred_region
        _
      $region28: #{mlp_head_forward.1} parent=11 // pred_fallthru
        _
      // Predicated region
      $region29: #{mlp_head_forward.1} parent=11 // pred_check
        %p196 = pneg %p143
      $region30: #{mlp_head_forward.1} parent=11 // pred_check_branch
        %198 = sbr.rel (%p196) target = $region32
      $region31: #{mlp_head_forward.1} parent=11 // pred_region
        _
      $region32: #{mlp_head_forward.1} parent=11 // pred_fallthru
        _
    $region12: #{mlp_head_forward.1} parent=5 // pred_fallthru
      _
    %p199 = scmp.lt.s32.totalorder %s12, 2
    // Predicated region
    $region33: #{mlp_head_forward.1} parent=5 // pred_check
      %p200 = pneg %p199
    $region34: #{mlp_head_forward.1} parent=5 // pred_check_branch
      %202 = sbr.rel (%p200) target = $region36
    $region35: #{mlp_head_forward.1} parent=5 // pred_region
      // Predicated region
      $region37: #{mlp_head_forward.1} parent=35 // pred_check
        %p203 = pneg %p32
      $region38: #{mlp_head_forward.1} parent=35 // pred_check_branch
        %205 = sbr.rel (%p203) target = $region40
      $region39: #{mlp_head_forward.1} parent=35 // pred_region
        %s206 = smul.u32 32, %s12
        %p207 = scmp.lt.s32.totalorder %s206, 63
        %s208 = scalar_select %p207, %s206, 63
        %s209 = smul.addr %s208, 8
        %s210 = scalar_lea.vmem %s0, %s209
        %s211 = smul.u32 32, %s12
      $region40: #{mlp_head_forward.1} parent=35 // pred_fallthru
        _
    $region36: #{mlp_head_forward.1} parent=5 // pred_fallthru
      _
    %p212 = scmp.le.s32.totalorder 1, %s12
    %p213 = scmp.lt.s32.totalorder %s12, 3
    %p214 = pnand %p212, %p213
    %p215 = pneg %p214
    // Predicated region
    $region41: #{mlp_head_forward.1} parent=5 // pred_check
      _
    $region42: #{mlp_head_forward.1} parent=5 // pred_check_branch
      %217 = sbr.rel (%p214) target = $region44
    $region43: #{mlp_head_forward.1} parent=5 // pred_region
      %s218 = ssub.s32 %s12, 1
      %s219 = smul.u32 32, %s17
      %p220 = scmp.lt.s32.totalorder %s219, 63
      %s221 = scalar_select %p220, %s219, 63
      %s222 = smul.addr %s221, 8
      %s223 = scalar_lea.vmem %s0, %s222
      %p224 = pneg %p38
      %p225 = pneg %p35
      %p226 = pneg %p59
      %p227 = pneg %p56
      %p228 = pneg %p80
      %p229 = pneg %p77
      %p230 = pneg %p101
      %p231 = pneg %p98
      %p232 = pneg %p122
      %p233 = pneg %p119
      %p234 = pneg %p143
      %p235 = pneg %p140
      %p236 = pneg %p169
      %p237 = pneg %p166
      %s238 = smul.u32 32, %s17
      %p239 = scmp.lt.s32.totalorder %s238, 63
      %s240 = scalar_select %p239, %s238, 63
      %s241 = smul.addr %s240, 8
      %s242 = scalar_lea.vmem %s6, %s241
      %s243 = smul.u32 32, %s17
      %p244 = scmp.lt.s32.totalorder %s243, 63
      %s245 = scalar_select %p244, %s243, 63
      %s246 = smul.addr %s245, 8
      %s247 = scalar_lea.vmem %s0, %s246
      %s248 = smul.u32 32, %s17
      %s249 = smul.u32 32, %s17
      %p250 = scmp.lt.s32.totalorder %s249, 63
      %s251 = scalar_select %p250, %s249, 63
      %s252 = smul.addr %s251, 8
      %s253 = scalar_lea.vmem %s6, %s252
      %s254 = smul.u32 32, %s17
      %v255 = vld [vmem:[%s247] sm:$0xff]
      %v256 = vld [vmem:[%s247 + $0x8] sm:$0xff]
      %v257 = vld [vmem:[%s247 + $0x10] sm:$0xff]
      %v258 = vld [vmem:[%s247 + $0x18] sm:$0xff]
      %v259 = vld [vmem:[%s247 + $0x20] sm:$0xff]
      %v260 = vld [vmem:[%s247 + $0x28] sm:$0xff]
      %v261 = vld [vmem:[%s247 + $0x30] sm:$0xff]
      %v262 = vld [vmem:[%s247 + $0x38] sm:$0xff]
      %v263 = vld [vmem:[%s247 + $0x40] sm:$0xff]
      %v264 = vld [vmem:[%s247 + $0x48] sm:$0xff]
      %v265 = vld [vmem:[%s247 + $0x50] sm:$0xff]
      %v266 = vld [vmem:[%s247 + $0x58] sm:$0xff]
      %v267 = vld [vmem:[%s247 + $0x60] sm:$0xff]
      %v268 = vld [vmem:[%s247 + $0x68] sm:$0xff]
      %v269 = vld [vmem:[%s247 + $0x70] sm:$0xff]
      %v270 = vld [vmem:[%s247 + $0x78] sm:$0xff]
      %v271 = vld [vmem:[%s247 + $0x80] sm:$0xff]
      %v272 = vld [vmem:[%s247 + $0x88] sm:$0xff]
      %v273 = vld [vmem:[%s247 + $0x90] sm:$0xff]
      %v274 = vld [vmem:[%s247 + $0x98] sm:$0xff]
      %v275 = vld [vmem:[%s247 + $0xa0] sm:$0xff]
      %v276 = vld [vmem:[%s247 + $0xa8] sm:$0xff]
      %v277 = vld [vmem:[%s247 + $0xb0] sm:$0xff]
      %v278 = vld [vmem:[%s247 + $0xb8] sm:$0xff]
      %v279 = vld [vmem:[%s247 + $0xc0] sm:$0xff]
      %v280 = vld [vmem:[%s247 + $0xc8] sm:$0xff]
      %v281 = vld [vmem:[%s247 + $0xd0] sm:$0xff]
      %v282 = vld [vmem:[%s247 + $0xd8] sm:$0xff]
      %v283 = vld [vmem:[%s247 + $0xe0] sm:$0xff]
      %v284 = vld [vmem:[%s247 + $0xe8] sm:$0xff]
      %v285 = vld [vmem:[%s247 + $0xf0] sm:$0xff]
      %v286 = vld [vmem:[%s247 + $0xf8] sm:$0xff]
      %v287 = vld [vmem:[%s1] sm:$0xff]
      %v288 = vld [vmem:[%s1 + $0x8] sm:$0xff]
      %v289 = vld [vmem:[%s1 + $0x10] sm:$0xff]
      %v290 = vld [vmem:[%s1 + $0x18] sm:$0xff]
      %v291 = vld [vmem:[%s1 + $0x20] sm:$0xff]
      %v292 = vld [vmem:[%s1 + $0x28] sm:$0xff]
      %v293 = vld [vmem:[%s1 + $0x30] sm:$0xff]
      %v294 = vld [vmem:[%s1 + $0x38] sm:$0xff]
      %v295 = vld [vmem:[%s2] sm:$0x1]
      %v297 = vlaneseq
      %v298 = vshrl.u32 %v297, 7
      %v299 = vsub.s32 0, %v298
      %v300 = vrot.slane %v295, %v299
      %vm302 = vcmask 523264
      %v304 = vsel %vm302, %v255, 0
      %v307 = vsel %vm302, %v256, 0
      %v310 = vsel %vm302, %v257, 0
      %v313 = vsel %vm302, %v258, 0
      %v316 = vsel %vm302, %v259, 0
      %v319 = vsel %vm302, %v260, 0
      %v322 = vsel %vm302, %v261, 0
      %v325 = vsel %vm302, %v262, 0
      %v328 = vsel %vm302, %v263, 0
      %v331 = vsel %vm302, %v264, 0
      %v334 = vsel %vm302, %v265, 0
      %v337 = vsel %vm302, %v266, 0
      %v340 = vsel %vm302, %v267, 0
      %v343 = vsel %vm302, %v268, 0
      %v346 = vsel %vm302, %v269, 0
      %v349 = vsel %vm302, %v270, 0
      %v352 = vsel %vm302, %v271, 0
      %v355 = vsel %vm302, %v272, 0
      %v358 = vsel %vm302, %v273, 0
      %v361 = vsel %vm302, %v274, 0
      %v364 = vsel %vm302, %v275, 0
      %v367 = vsel %vm302, %v276, 0
      %v370 = vsel %vm302, %v277, 0
      %v373 = vsel %vm302, %v278, 0
      %v376 = vsel %vm302, %v279, 0
      %v379 = vsel %vm302, %v280, 0
      %v382 = vsel %vm302, %v281, 0
      %v385 = vsel %vm302, %v282, 0
      %v388 = vsel %vm302, %v283, 0
      %v391 = vsel %vm302, %v284, 0
      %v394 = vsel %vm302, %v285, 0
      %v397 = vsel %vm302, %v286, 0
      %399 = vmatprep.subr.mxu0 0.0
      %400 = vmatpush1.msra.mxu0 %v287
      %401 = vmatprep.subr.mxu0 0.0
      %402 = vmatpush1.msra.mxu0 %v288
      %403 = vmatprep.subr.mxu0 0.0
      %404 = vmatpush1.msra.mxu0 %v289
      %405 = vmatprep.subr.mxu0 0.0
      %406 = vmatpush1.msra.mxu0 %v290
      %407 = vmatprep.subr.mxu0 0.0
      %408 = vmatpush1.msra.mxu0 %v291
      %409 = vmatprep.subr.mxu0 0.0
      %410 = vmatpush1.msra.mxu0 %v292
      %411 = vmatprep.subr.mxu0 0.0
      %412 = vmatpush1.msra.mxu0 %v293
      %413 = vmatprep.subr.mxu0 0.0
      %414 = vmatpush1.msra.mxu0 %v294
      %415 = vmatprep.subr.mxu0 0.0
      %416 = vmatpush1.msra.mxu0 0.0
      %417 = vmatprep.subr.mxu0 0.0
      %418 = vmatpush1.msra.mxu0 0.0
      %419 = vmatprep.subr.mxu0 0.0
      %420 = vmatpush1.msra.mxu0 0.0
      %421 = vmatprep.subr.mxu0 0.0
      %422 = vmatpush1.msra.mxu0 0.0
      %423 = vmatprep.subr.mxu0 0.0
      %424 = vmatpush1.msra.mxu0 0.0
      %425 = vmatprep.subr.mxu0 0.0
      %426 = vmatpush1.msra.mxu0 0.0
      %427 = vmatprep.subr.mxu0 0.0
      %428 = vmatpush1.msra.mxu0 0.0
      %429 = vmatprep.subr.mxu0 0.0
      %430 = vmatpush1.msra.mxu0 0.0
      %431 = vmatprep.subr.mxu0 0.0
      %432 = vmatpush1.msra.mxu0 0.0
      %433 = vmatprep.subr.mxu0 0.0
      %434 = vmatpush1.msra.mxu0 0.0
      %435 = vmatprep.subr.mxu0 0.0
      %436 = vmatpush1.msra.mxu0 0.0
      %437 = vmatprep.subr.mxu0 0.0
      %438 = vmatpush1.msra.mxu0 0.0
      %439 = vmatprep.subr.mxu0 0.0
      %440 = vmatpush1.msra.mxu0 0.0
      %441 = vmatprep.subr.mxu0 0.0
      %442 = vmatpush1.msra.mxu0 0.0
      %443 = vmatprep.subr.mxu0 0.0
      %444 = vmatpush1.msra.mxu0 0.0
      %445 = vmatprep.subr.mxu0 0.0
      %446 = vmatpush1.msra.mxu0 0.0
      %447 = vmatprep.subr.mxu0 0.0
      %448 = vmatpush1.msra.mxu0 0.0
      %449 = vmatprep.subr.mxu0 0.0
      %450 = vmatpush1.msra.mxu0 0.0
      %451 = vmatprep.subr.mxu0 0.0
      %452 = vmatpush1.msra.mxu0 0.0
      %453 = vmatprep.subr.mxu0 0.0
      %454 = vmatpush1.msra.mxu0 0.0
      %455 = vmatprep.subr.mxu0 0.0
      %456 = vmatpush1.msra.mxu0 0.0
      %457 = vmatprep.subr.mxu0 0.0
      %458 = vmatpush1.msra.mxu0 0.0
      %459 = vmatprep.subr.mxu0 0.0
      %460 = vmatpush1.msra.mxu0 0.0
      %461 = vmatprep.subr.mxu0 0.0
      %462 = vmatpush1.msra.mxu0 0.0
      %463 = vmatprep.mubr.f32.mxu0 0.0
      %464 = vmatmul.mubr.f32.gmra.mrb[0].mxu0 %v304
      %v465 = vpop.f32.mrb[0].mxu0
      %v466 = vadd.f32 %v300, %v465
      %v467 = vpop.f32.mrb[0].mxu0
      %468 = vmatprep.mubr.f32.mxu0 0.0
      %469 = vmatmul.mubr.f32.gmra.mrb[0].mxu0 %v307
      %v470 = vpop.f32.mrb[0].mxu0
      %v471 = vadd.f32 %v300, %v470
      %v472 = vpop.f32.mrb[0].mxu0
      %473 = vmatprep.mubr.f32.mxu0 0.0
      %474 = vmatmul.mubr.f32.gmra.mrb[0].mxu0 %v310
      %v475 = vpop.f32.mrb[0].mxu0
      %v476 = vadd.f32 %v300, %v475
      %v477 = vpop.f32.mrb[0].mxu0
      %478 = vmatprep.mubr.f32.mxu0 0.0
      %479 = vmatmul.mubr.f32.gmra.mrb[0].mxu0 %v313
      %v480 = vpop.f32.mrb[0].mxu0
      %v481 = vadd.f32 %v300, %v480
      %v482 = vpop.f32.mrb[0].mxu0
      %483 = vmatprep.mubr.f32.mxu0 0.0
      %484 = vmatmul.mubr.f32.gmra.mrb[0].mxu0 %v316
      %v485 = vpop.f32.mrb[0].mxu0
      %v486 = vadd.f32 %v300, %v485
      %v487 = vpop.f32.mrb[0].mxu0
      %488 = vmatprep.mubr.f32.mxu0 0.0
      %489 = vmatmul.mubr.f32.gmra.mrb[0].mxu0 %v319
      %v490 = vpop.f32.mrb[0].mxu0
      %v491 = vadd.f32 %v300, %v490
      %v492 = vpop.f32.mrb[0].mxu0
      %493 = vmatprep.mubr.f32.mxu0 0.0
      %494 = vmatmul.mubr.f32.gmra.mrb[0].mxu0 %v322
      %v495 = vpop.f32.mrb[0].mxu0
      %v496 = vadd.f32 %v300, %v495
      %v497 = vpop.f32.mrb[0].mxu0
      %498 = vmatprep.mubr.f32.mxu0 0.0
      %499 = vmatmul.mubr.f32.gmra.mrb[0].mxu0 %v325
      %v500 = vpop.f32.mrb[0].mxu0
      %v501 = vadd.f32 %v300, %v500
      %v502 = vpop.f32.mrb[0].mxu0
      %503 = vmatprep.mubr.f32.mxu0 0.0
      %504 = vmatmul.mubr.f32.gmra.mrb[0].mxu0 %v328
      %v505 = vpop.f32.mrb[0].mxu0
      %v506 = vadd.f32 %v300, %v505
      %v507 = vpop.f32.mrb[0].mxu0
      %508 = vmatprep.mubr.f32.mxu0 0.0
      %509 = vmatmul.mubr.f32.gmra.mrb[0].mxu0 %v331
      %v510 = vpop.f32.mrb[0].mxu0
      %v511 = vadd.f32 %v300, %v510
      %v512 = vpop.f32.mrb[0].mxu0
      %513 = vmatprep.mubr.f32.mxu0 0.0
      %514 = vmatmul.mubr.f32.gmra.mrb[0].mxu0 %v334
      %v515 = vpop.f32.mrb[0].mxu0
      %v516 = vadd.f32 %v300, %v515
      %v517 = vpop.f32.mrb[0].mxu0
      %518 = vmatprep.mubr.f32.mxu0 0.0
      %519 = vmatmul.mubr.f32.gmra.mrb[0].mxu0 %v337
      %v520 = vpop.f32.mrb[0].mxu0
      %v521 = vadd.f32 %v300, %v520
      %v522 = vpop.f32.mrb[0].mxu0
      %523 = vmatprep.mubr.f32.mxu0 0.0
      %524 = vmatmul.mubr.f32.gmra.mrb[0].mxu0 %v340
      %v525 = vpop.f32.mrb[0].mxu0
      %v526 = vadd.f32 %v300, %v525
      %v527 = vpop.f32.mrb[0].mxu0
      %528 = vmatprep.mubr.f32.mxu0 0.0
      %529 = vmatmul.mubr.f32.gmra.mrb[0].mxu0 %v343
      %v530 = vpop.f32.mrb[0].mxu0
      %v531 = vadd.f32 %v300, %v530
      %v532 = vpop.f32.mrb[0].mxu0
      %533 = vmatprep.mubr.f32.mxu0 0.0
      %534 = vmatmul.mubr.f32.gmra.mrb[0].mxu0 %v346
      %v535 = vpop.f32.mrb[0].mxu0
      %v536 = vadd.f32 %v300, %v535
      %v537 = vpop.f32.mrb[0].mxu0
      %538 = vmatprep.mubr.f32.mxu0 0.0
      %539 = vmatmul.mubr.f32.gmra.mrb[0].mxu0 %v349
      %v540 = vpop.f32.mrb[0].mxu0
      %v541 = vadd.f32 %v300, %v540
      %v542 = vpop.f32.mrb[0].mxu0
      %543 = vmatprep.mubr.f32.mxu0 0.0
      %544 = vmatmul.mubr.f32.gmra.mrb[0].mxu0 %v352
      %v545 = vpop.f32.mrb[0].mxu0
      %v546 = vadd.f32 %v300, %v545
      %v547 = vpop.f32.mrb[0].mxu0
      %548 = vmatprep.mubr.f32.mxu0 0.0
      %549 = vmatmul.mubr.f32.gmra.mrb[0].mxu0 %v355
      %v550 = vpop.f32.mrb[0].mxu0
      %v551 = vadd.f32 %v300, %v550
      %v552 = vpop.f32.mrb[0].mxu0
      %553 = vmatprep.mubr.f32.mxu0 0.0
      %554 = vmatmul.mubr.f32.gmra.mrb[0].mxu0 %v358
      %v555 = vpop.f32.mrb[0].mxu0
      %v556 = vadd.f32 %v300, %v555
      %v557 = vpop.f32.mrb[0].mxu0
      %558 = vmatprep.mubr.f32.mxu0 0.0
      %559 = vmatmul.mubr.f32.gmra.mrb[0].mxu0 %v361
      %v560 = vpop.f32.mrb[0].mxu0
      %v561 = vadd.f32 %v300, %v560
      %v562 = vpop.f32.mrb[0].mxu0
      %563 = vmatprep.mubr.f32.mxu0 0.0
      %564 = vmatmul.mubr.f32.gmra.mrb[0].mxu0 %v364
      %v565 = vpop.f32.mrb[0].mxu0
      %v566 = vadd.f32 %v300, %v565
      %v567 = vpop.f32.mrb[0].mxu0
      %568 = vmatprep.mubr.f32.mxu0 0.0
      %569 = vmatmul.mubr.f32.gmra.mrb[0].mxu0 %v367
      %v570 = vpop.f32.mrb[0].mxu0
      %v571 = vadd.f32 %v300, %v570
      %v572 = vpop.f32.mrb[0].mxu0
      %573 = vmatprep.mubr.f32.mxu0 0.0
      %574 = vmatmul.mubr.f32.gmra.mrb[0].mxu0 %v370
      %v575 = vpop.f32.mrb[0].mxu0
      %v576 = vadd.f32 %v300, %v575
      %v577 = vpop.f32.mrb[0].mxu0
      %578 = vmatprep.mubr.f32.mxu0 0.0
      %579 = vmatmul.mubr.f32.gmra.mrb[0].mxu0 %v373
      %v580 = vpop.f32.mrb[0].mxu0
      %v581 = vadd.f32 %v300, %v580
      %v582 = vpop.f32.mrb[0].mxu0
      %583 = vmatprep.mubr.f32.mxu0 0.0
      %584 = vmatmul.mubr.f32.gmra.mrb[0].mxu0 %v376
      %v585 = vpop.f32.mrb[0].mxu0
      %v586 = vadd.f32 %v300, %v585
      %v587 = vpop.f32.mrb[0].mxu0
      %588 = vmatprep.mubr.f32.mxu0 0.0
      %589 = vmatmul.mubr.f32.gmra.mrb[0].mxu0 %v379
      %v590 = vpop.f32.mrb[0].mxu0
      %v591 = vadd.f32 %v300, %v590
      %v592 = vpop.f32.mrb[0].mxu0
      %593 = vmatprep.mubr.f32.mxu0 0.0
      %594 = vmatmul.mubr.f32.gmra.mrb[0].mxu0 %v382
      %v595 = vpop.f32.mrb[0].mxu0
      %v596 = vadd.f32 %v300, %v595
      %v597 = vpop.f32.mrb[0].mxu0
      %598 = vmatprep.mubr.f32.mxu0 0.0
      %599 = vmatmul.mubr.f32.gmra.mrb[0].mxu0 %v385
      %v600 = vpop.f32.mrb[0].mxu0
      %v601 = vadd.f32 %v300, %v600
      %v602 = vpop.f32.mrb[0].mxu0
      %603 = vmatprep.mubr.f32.mxu0 0.0
      %604 = vmatmul.mubr.f32.gmra.mrb[0].mxu0 %v388
      %v605 = vpop.f32.mrb[0].mxu0
      %v606 = vadd.f32 %v300, %v605
      %v607 = vpop.f32.mrb[0].mxu0
      %608 = vmatprep.mubr.f32.mxu0 0.0
      %609 = vmatmul.mubr.f32.gmra.mrb[0].mxu0 %v391
      %v610 = vpop.f32.mrb[0].mxu0
      %v611 = vadd.f32 %v300, %v610
      %v612 = vpop.f32.mrb[0].mxu0
      %613 = vmatprep.mubr.f32.mxu0 0.0
      %614 = vmatmul.mubr.f32.gmra.mrb[0].mxu0 %v394
      %v615 = vpop.f32.mrb[0].mxu0
      %v616 = vadd.f32 %v300, %v615
      %v617 = vpop.f32.mrb[0].mxu0
      %618 = vmatprep.mubr.f32.mxu0 0.0
      %619 = vmatmul.mubr.f32.gmra.mrb[0].mxu0 %v397
      %v620 = vpop.f32.mrb[0].mxu0
      %v621 = vadd.f32 %v300, %v620
      %v622 = vpop.f32.mrb[0].mxu0
      %623 = vdwg.mxu0
      %v624 = vmax.f32 %v466, 0.0
      %v625 = vmax.f32 %v471, 0.0
      %v626 = vmax.f32 %v476, 0.0
      %v627 = vmax.f32 %v481, 0.0
      %v628 = vmax.f32 %v486, 0.0
      %v629 = vmax.f32 %v491, 0.0
      %v630 = vmax.f32 %v496, 0.0
      %v631 = vmax.f32 %v501, 0.0
      %v632 = vmax.f32 %v506, 0.0
      %v633 = vmax.f32 %v511, 0.0
      %v634 = vmax.f32 %v516, 0.0
      %v635 = vmax.f32 %v521, 0.0
      %v636 = vmax.f32 %v526, 0.0
      %v637 = vmax.f32 %v531, 0.0
      %v638 = vmax.f32 %v536, 0.0
      %v639 = vmax.f32 %v541, 0.0
      %v640 = vmax.f32 %v546, 0.0
      %v641 = vmax.f32 %v551, 0.0
      %v642 = vmax.f32 %v556, 0.0
      %v643 = vmax.f32 %v561, 0.0
      %v644 = vmax.f32 %v566, 0.0
      %v645 = vmax.f32 %v571, 0.0
      %v646 = vmax.f32 %v576, 0.0
      %v647 = vmax.f32 %v581, 0.0
      %v648 = vmax.f32 %v586, 0.0
      %v649 = vmax.f32 %v591, 0.0
      %v650 = vmax.f32 %v596, 0.0
      %v651 = vmax.f32 %v601, 0.0
      %v652 = vmax.f32 %v606, 0.0
      %v653 = vmax.f32 %v611, 0.0
      %v654 = vmax.f32 %v616, 0.0
      %v655 = vmax.f32 %v621, 0.0
      %v656 = vld [vmem:[%s3] sm:$0xff]
      %v657 = vld [vmem:[%s3 + $0x8] sm:$0xff]
      %v658 = vld [vmem:[%s3 + $0x10] sm:$0xff]
      %v659 = vld [vmem:[%s3 + $0x18] sm:$0xff]
      %v660 = vld [vmem:[%s3 + $0x20] sm:$0xff]
      %v661 = vld [vmem:[%s3 + $0x28] sm:$0xff]
      %v662 = vld [vmem:[%s3 + $0x30] sm:$0xff]
      %v663 = vld [vmem:[%s3 + $0x38] sm:$0xff]
      %v664 = vld [vmem:[%s4] sm:$0x1]
      %v666 = vlaneseq
      %v667 = vshrl.u32 %v666, 7
      %v668 = vsub.s32 0, %v667
      %v669 = vrot.slane %v664, %v668
      %v672 = vsel %vm302, %v624, 0
      %v675 = vsel %vm302, %v625, 0
      %v678 = vsel %vm302, %v626, 0
      %v681 = vsel %vm302, %v627, 0
      %v684 = vsel %vm302, %v628, 0
      %v687 = vsel %vm302, %v629, 0
      %v690 = vsel %vm302, %v630, 0
      %v693 = vsel %vm302, %v631, 0
      %v696 = vsel %vm302, %v632, 0
      %v699 = vsel %vm302, %v633, 0
      %v702 = vsel %vm302, %v634, 0
      %v705 = vsel %vm302, %v635, 0
      %v708 = vsel %vm302, %v636, 0
      %v711 = vsel %vm302, %v637, 0
      %v714 = vsel %vm302, %v638, 0
      %v717 = vsel %vm302, %v639, 0
      %v720 = vsel %vm302, %v640, 0
      %v723 = vsel %vm302, %v641, 0
      %v726 = vsel %vm302, %v642, 0
      %v729 = vsel %vm302, %v643, 0
      %v732 = vsel %vm302, %v644, 0
      %v735 = vsel %vm302, %v645, 0
      %v738 = vsel %vm302, %v646, 0
      %v741 = vsel %vm302, %v647, 0
      %v744 = vsel %vm302, %v648, 0
      %v747 = vsel %vm302, %v649, 0
      %v750 = vsel %vm302, %v650, 0
      %v753 = vsel %vm302, %v651, 0
      %v756 = vsel %vm302, %v652, 0
      %v759 = vsel %vm302, %v653, 0
      %v762 = vsel %vm302, %v654, 0
      %v765 = vsel %vm302, %v655, 0
      %767 = vmatprep.subr.mxu0 0.0
      %768 = vmatpush1.msra.mxu0 %v656
      %769 = vmatprep.subr.mxu0 0.0
      %770 = vmatpush1.msra.mxu0 %v657
      %771 = vmatprep.subr.mxu0 0.0
      %772 = vmatpush1.msra.mxu0 %v658
      %773 = vmatprep.subr.mxu0 0.0
      %774 = vmatpush1.msra.mxu0 %v659
      %775 = vmatprep.subr.mxu0 0.0
      %776 = vmatpush1.msra.mxu0 %v660
      %777 = vmatprep.subr.mxu0 0.0
      %778 = vmatpush1.msra.mxu0 %v661
      %779 = vmatprep.subr.mxu0 0.0
      %780 = vmatpush1.msra.mxu0 %v662
      %781 = vmatprep.subr.mxu0 0.0
      %782 = vmatpush1.msra.mxu0 %v663
      %783 = vmatprep.subr.mxu0 0.0
      %784 = vmatpush1.msra.mxu0 0.0
      %785 = vmatprep.subr.mxu0 0.0
      %786 = vmatpush1.msra.mxu0 0.0
      %787 = vmatprep.subr.mxu0 0.0
      %788 = vmatpush1.msra.mxu0 0.0
      %789 = vmatprep.subr.mxu0 0.0
      %790 = vmatpush1.msra.mxu0 0.0
      %791 = vmatprep.subr.mxu0 0.0
      %792 = vmatpush1.msra.mxu0 0.0
      %793 = vmatprep.subr.mxu0 0.0
      %794 = vmatpush1.msra.mxu0 0.0
      %795 = vmatprep.subr.mxu0 0.0
      %796 = vmatpush1.msra.mxu0 0.0
      %797 = vmatprep.subr.mxu0 0.0
      %798 = vmatpush1.msra.mxu0 0.0
      %799 = vmatprep.subr.mxu0 0.0
      %800 = vmatpush1.msra.mxu0 0.0
      %801 = vmatprep.subr.mxu0 0.0
      %802 = vmatpush1.msra.mxu0 0.0
      %803 = vmatprep.subr.mxu0 0.0
      %804 = vmatpush1.msra.mxu0 0.0
      %805 = vmatprep.subr.mxu0 0.0
      %806 = vmatpush1.msra.mxu0 0.0
      %807 = vmatprep.subr.mxu0 0.0
      %808 = vmatpush1.msra.mxu0 0.0
      %809 = vmatprep.subr.mxu0 0.0
      %810 = vmatpush1.msra.mxu0 0.0
      %811 = vmatprep.subr.mxu0 0.0
      %812 = vmatpush1.msra.mxu0 0.0
      %813 = vmatprep.subr.mxu0 0.0
      %814 = vmatpush1.msra.mxu0 0.0
      %815 = vmatprep.subr.mxu0 0.0
      %816 = vmatpush1.msra.mxu0 0.0
      %817 = vmatprep.subr.mxu0 0.0
      %818 = vmatpush1.msra.mxu0 0.0
      %819 = vmatprep.subr.mxu0 0.0
      %820 = vmatpush1.msra.mxu0 0.0
      %821 = vmatprep.subr.mxu0 0.0
      %822 = vmatpush1.msra.mxu0 0.0
      %823 = vmatprep.subr.mxu0 0.0
      %824 = vmatpush1.msra.mxu0 0.0
      %825 = vmatprep.subr.mxu0 0.0
      %826 = vmatpush1.msra.mxu0 0.0
      %827 = vmatprep.subr.mxu0 0.0
      %828 = vmatpush1.msra.mxu0 0.0
      %829 = vmatprep.subr.mxu0 0.0
      %830 = vmatpush1.msra.mxu0 0.0
      %831 = vmatprep.mubr.f32.mxu0 0.0
      %832 = vmatmul.mubr.f32.gmra.mrb[0].mxu0 %v672
      %v833 = vpop.f32.mrb[0].mxu0
      %v834 = vadd.f32 %v669, %v833
      %v835 = vpop.f32.mrb[0].mxu0
      %836 = vmatprep.mubr.f32.mxu0 0.0
      %837 = vmatmul.mubr.f32.gmra.mrb[0].mxu0 %v675
      %v838 = vpop.f32.mrb[0].mxu0
      %v839 = vadd.f32 %v669, %v838
      %v840 = vpop.f32.mrb[0].mxu0
      %841 = vmatprep.mubr.f32.mxu0 0.0
      %842 = vmatmul.mubr.f32.gmra.mrb[0].mxu0 %v678
      %v843 = vpop.f32.mrb[0].mxu0
      %v844 = vadd.f32 %v669, %v843
      %v845 = vpop.f32.mrb[0].mxu0
      %846 = vmatprep.mubr.f32.mxu0 0.0
      %847 = vmatmul.mubr.f32.gmra.mrb[0].mxu0 %v681
      %v848 = vpop.f32.mrb[0].mxu0
      %v849 = vadd.f32 %v669, %v848
      %v850 = vpop.f32.mrb[0].mxu0
      %851 = vmatprep.mubr.f32.mxu0 0.0
      %852 = vmatmul.mubr.f32.gmra.mrb[0].mxu0 %v684
      %v853 = vpop.f32.mrb[0].mxu0
      %v854 = vadd.f32 %v669, %v853
      %v855 = vpop.f32.mrb[0].mxu0
      %856 = vmatprep.mubr.f32.mxu0 0.0
      %857 = vmatmul.mubr.f32.gmra.mrb[0].mxu0 %v687
      %v858 = vpop.f32.mrb[0].mxu0
      %v859 = vadd.f32 %v669, %v858
      %v860 = vpop.f32.mrb[0].mxu0
      %861 = vmatprep.mubr.f32.mxu0 0.0
      %862 = vmatmul.mubr.f32.gmra.mrb[0].mxu0 %v690
      %v863 = vpop.f32.mrb[0].mxu0
      %v864 = vadd.f32 %v669, %v863
      %v865 = vpop.f32.mrb[0].mxu0
      %866 = vmatprep.mubr.f32.mxu0 0.0
      %867 = vmatmul.mubr.f32.gmra.mrb[0].mxu0 %v693
      %v868 = vpop.f32.mrb[0].mxu0
      %v869 = vadd.f32 %v669, %v868
      %v870 = vpop.f32.mrb[0].mxu0
      %871 = vmatprep.mubr.f32.mxu0 0.0
      %872 = vmatmul.mubr.f32.gmra.mrb[0].mxu0 %v696
      %v873 = vpop.f32.mrb[0].mxu0
      %v874 = vadd.f32 %v669, %v873
      %v875 = vpop.f32.mrb[0].mxu0
      %876 = vmatprep.mubr.f32.mxu0 0.0
      %877 = vmatmul.mubr.f32.gmra.mrb[0].mxu0 %v699
      %v878 = vpop.f32.mrb[0].mxu0
      %v879 = vadd.f32 %v669, %v878
      %v880 = vpop.f32.mrb[0].mxu0
      %881 = vmatprep.mubr.f32.mxu0 0.0
      %882 = vmatmul.mubr.f32.gmra.mrb[0].mxu0 %v702
      %v883 = vpop.f32.mrb[0].mxu0
      %v884 = vadd.f32 %v669, %v883
      %v885 = vpop.f32.mrb[0].mxu0
      %886 = vmatprep.mubr.f32.mxu0 0.0
      %887 = vmatmul.mubr.f32.gmra.mrb[0].mxu0 %v705
      %v888 = vpop.f32.mrb[0].mxu0
      %v889 = vadd.f32 %v669, %v888
      %v890 = vpop.f32.mrb[0].mxu0
      %891 = vmatprep.mubr.f32.mxu0 0.0
      %892 = vmatmul.mubr.f32.gmra.mrb[0].mxu0 %v708
      %v893 = vpop.f32.mrb[0].mxu0
      %v894 = vadd.f32 %v669, %v893
      %v895 = vpop.f32.mrb[0].mxu0
      %896 = vmatprep.mubr.f32.mxu0 0.0
      %897 = vmatmul.mubr.f32.gmra.mrb[0].mxu0 %v711
      %v898 = vpop.f32.mrb[0].mxu0
      %v899 = vadd.f32 %v669, %v898
      %v900 = vpop.f32.mrb[0].mxu0
      %901 = vmatprep.mubr.f32.mxu0 0.0
      %902 = vmatmul.mubr.f32.gmra.mrb[0].mxu0 %v714
      %v903 = vpop.f32.mrb[0].mxu0
      %v904 = vadd.f32 %v669, %v903
      %v905 = vpop.f32.mrb[0].mxu0
      %906 = vmatprep.mubr.f32.mxu0 0.0
      %907 = vmatmul.mubr.f32.gmra.mrb[0].mxu0 %v717
      %v908 = vpop.f32.mrb[0].mxu0
      %v909 = vadd.f32 %v669, %v908
      %v910 = vpop.f32.mrb[0].mxu0
      %911 = vmatprep.mubr.f32.mxu0 0.0
      %912 = vmatmul.mubr.f32.gmra.mrb[0].mxu0 %v720
      %v913 = vpop.f32.mrb[0].mxu0
      %v914 = vadd.f32 %v669, %v913
      %v915 = vpop.f32.mrb[0].mxu0
      %916 = vmatprep.mubr.f32.mxu0 0.0
      %917 = vmatmul.mubr.f32.gmra.mrb[0].mxu0 %v723
      %v918 = vpop.f32.mrb[0].mxu0
      %v919 = vadd.f32 %v669, %v918
      %v920 = vpop.f32.mrb[0].mxu0
      %921 = vmatprep.mubr.f32.mxu0 0.0
      %922 = vmatmul.mubr.f32.gmra.mrb[0].mxu0 %v726
      %v923 = vpop.f32.mrb[0].mxu0
      %v924 = vadd.f32 %v669, %v923
      %v925 = vpop.f32.mrb[0].mxu0
      %926 = vmatprep.mubr.f32.mxu0 0.0
      %927 = vmatmul.mubr.f32.gmra.mrb[0].mxu0 %v729
      %v928 = vpop.f32.mrb[0].mxu0
      %v929 = vadd.f32 %v669, %v928
      %v930 = vpop.f32.mrb[0].mxu0
      %931 = vmatprep.mubr.f32.mxu0 0.0
      %932 = vmatmul.mubr.f32.gmra.mrb[0].mxu0 %v732
      %v933 = vpop.f32.mrb[0].mxu0
      %v934 = vadd.f32 %v669, %v933
      %v935 = vpop.f32.mrb[0].mxu0
      %936 = vmatprep.mubr.f32.mxu0 0.0
      %937 = vmatmul.mubr.f32.gmra.mrb[0].mxu0 %v735
      %v938 = vpop.f32.mrb[0].mxu0
      %v939 = vadd.f32 %v669, %v938
      %v940 = vpop.f32.mrb[0].mxu0
      %941 = vmatprep.mubr.f32.mxu0 0.0
      %942 = vmatmul.mubr.f32.gmra.mrb[0].mxu0 %v738
      %v943 = vpop.f32.mrb[0].mxu0
      %v944 = vadd.f32 %v669, %v943
      %v945 = vpop.f32.mrb[0].mxu0
      %946 = vmatprep.mubr.f32.mxu0 0.0
      %947 = vmatmul.mubr.f32.gmra.mrb[0].mxu0 %v741
      %v948 = vpop.f32.mrb[0].mxu0
      %v949 = vadd.f32 %v669, %v948
      %v950 = vpop.f32.mrb[0].mxu0
      %951 = vmatprep.mubr.f32.mxu0 0.0
      %952 = vmatmul.mubr.f32.gmra.mrb[0].mxu0 %v744
      %v953 = vpop.f32.mrb[0].mxu0
      %v954 = vadd.f32 %v669, %v953
      %v955 = vpop.f32.mrb[0].mxu0
      %956 = vmatprep.mubr.f32.mxu0 0.0
      %957 = vmatmul.mubr.f32.gmra.mrb[0].mxu0 %v747
      %v958 = vpop.f32.mrb[0].mxu0
      %v959 = vadd.f32 %v669, %v958
      %v960 = vpop.f32.mrb[0].mxu0
      %961 = vmatprep.mubr.f32.mxu0 0.0
      %962 = vmatmul.mubr.f32.gmra.mrb[0].mxu0 %v750
      %v963 = vpop.f32.mrb[0].mxu0
      %v964 = vadd.f32 %v669, %v963
      %v965 = vpop.f32.mrb[0].mxu0
      %966 = vmatprep.mubr.f32.mxu0 0.0
      %967 = vmatmul.mubr.f32.gmra.mrb[0].mxu0 %v753
      %v968 = vpop.f32.mrb[0].mxu0
      %v969 = vadd.f32 %v669, %v968
      %v970 = vpop.f32.mrb[0].mxu0
      %971 = vmatprep.mubr.f32.mxu0 0.0
      %972 = vmatmul.mubr.f32.gmra.mrb[0].mxu0 %v756
      %v973 = vpop.f32.mrb[0].mxu0
      %v974 = vadd.f32 %v669, %v973
      %v975 = vpop.f32.mrb[0].mxu0
      %976 = vmatprep.mubr.f32.mxu0 0.0
      %977 = vmatmul.mubr.f32.gmra.mrb[0].mxu0 %v759
      %v978 = vpop.f32.mrb[0].mxu0
      %v979 = vadd.f32 %v669, %v978
      %v980 = vpop.f32.mrb[0].mxu0
      %981 = vmatprep.mubr.f32.mxu0 0.0
      %982 = vmatmul.mubr.f32.gmra.mrb[0].mxu0 %v762
      %v983 = vpop.f32.mrb[0].mxu0
      %v984 = vadd.f32 %v669, %v983
      %v985 = vpop.f32.mrb[0].mxu0
      %986 = vmatprep.mubr.f32.mxu0 0.0
      %987 = vmatmul.mubr.f32.gmra.mrb[0].mxu0 %v765
      %v988 = vpop.f32.mrb[0].mxu0
      %v989 = vadd.f32 %v669, %v988
      %v990 = vpop.f32.mrb[0].mxu0
      %991 = vdwg.mxu0
      %v992 = vmax.f32 %v834, 0.0
      %v993 = vmax.f32 %v839, 0.0
      %v994 = vmax.f32 %v844, 0.0
      %v995 = vmax.f32 %v849, 0.0
      %v996 = vmax.f32 %v854, 0.0
      %v997 = vmax.f32 %v859, 0.0
      %v998 = vmax.f32 %v864, 0.0
      %v999 = vmax.f32 %v869, 0.0
      %v1000 = vmax.f32 %v874, 0.0
      %v1001 = vmax.f32 %v879, 0.0
      %v1002 = vmax.f32 %v884, 0.0
      %v1003 = vmax.f32 %v889, 0.0
      %v1004 = vmax.f32 %v894, 0.0
      %v1005 = vmax.f32 %v899, 0.0
      %v1006 = vmax.f32 %v904, 0.0
      %v1007 = vmax.f32 %v909, 0.0
      %v1008 = vmax.f32 %v914, 0.0
      %v1009 = vmax.f32 %v919, 0.0
      %v1010 = vmax.f32 %v924, 0.0
      %v1011 = vmax.f32 %v929, 0.0
      %v1012 = vmax.f32 %v934, 0.0
      %v1013 = vmax.f32 %v939, 0.0
      %v1014 = vmax.f32 %v944, 0.0
      %v1015 = vmax.f32 %v949, 0.0
      %v1016 = vmax.f32 %v954, 0.0
      %v1017 = vmax.f32 %v959, 0.0
      %v1018 = vmax.f32 %v964, 0.0
      %v1019 = vmax.f32 %v969, 0.0
      %v1020 = vmax.f32 %v974, 0.0
      %v1021 = vmax.f32 %v979, 0.0
      %v1022 = vmax.f32 %v984, 0.0
      %v1023 = vmax.f32 %v989, 0.0
      %v1024 = vld [vmem:[%s5] sm:$0xff]
      %v1025 = vld [vmem:[%s5 + $0x8] sm:$0xff]
      %v1026 = vld [vmem:[%s5 + $0x10] sm:$0xff]
      %v1027 = vld [vmem:[%s5 + $0x18] sm:$0xff]
      %v1028 = vld [vmem:[%s5 + $0x20] sm:$0xff]
      %v1029 = vld [vmem:[%s5 + $0x28] sm:$0xff]
      %v1030 = vld [vmem:[%s5 + $0x30] sm:$0xff]
      %v1031 = vld [vmem:[%s5 + $0x38] sm:$0xff]
      %v1033 = vsel %vm302, %v992, 0
      %v1036 = vsel %vm302, %v993, 0
      %v1039 = vsel %vm302, %v994, 0
      %v1042 = vsel %vm302, %v995, 0
      %v1045 = vsel %vm302, %v996, 0
      %v1048 = vsel %vm302, %v997, 0
      %v1051 = vsel %vm302, %v998, 0
      %v1054 = vsel %vm302, %v999, 0
      %v1057 = vsel %vm302, %v1000, 0
      %v1060 = vsel %vm302, %v1001, 0
      %v1063 = vsel %vm302, %v1002, 0
      %v1066 = vsel %vm302, %v1003, 0
      %v1069 = vsel %vm302, %v1004, 0
      %v1072 = vsel %vm302, %v1005, 0
      %v1075 = vsel %vm302, %v1006, 0
      %v1078 = vsel %vm302, %v1007, 0
      %v1081 = vsel %vm302, %v1008, 0
      %v1084 = vsel %vm302, %v1009, 0
      %v1087 = vsel %vm302, %v1010, 0
      %v1090 = vsel %vm302, %v1011, 0
      %v1093 = vsel %vm302, %v1012, 0
      %v1096 = vsel %vm302, %v1013, 0
      %v1099 = vsel %vm302, %v1014, 0
      %v1102 = vsel %vm302, %v1015, 0
      %v1105 = vsel %vm302, %v1016, 0
      %v1108 = vsel %vm302, %v1017, 0
      %v1111 = vsel %vm302, %v1018, 0
      %v1114 = vsel %vm302, %v1019, 0
      %v1117 = vsel %vm302, %v1020, 0
      %v1120 = vsel %vm302, %v1021, 0
      %v1123 = vsel %vm302, %v1022, 0
      %v1126 = vsel %vm302, %v1023, 0
      %1128 = vmatprep.subr.mxu0 0.0
      %1129 = vmatpush1.msra.mxu0 %v1024
      %1130 = vmatprep.subr.mxu0 0.0
      %1131 = vmatpush1.msra.mxu0 %v1025
      %1132 = vmatprep.subr.mxu0 0.0
      %1133 = vmatpush1.msra.mxu0 %v1026
      %1134 = vmatprep.subr.mxu0 0.0
      %1135 = vmatpush1.msra.mxu0 %v1027
      %1136 = vmatprep.subr.mxu0 0.0
      %1137 = vmatpush1.msra.mxu0 %v1028
      %1138 = vmatprep.subr.mxu0 0.0
      %1139 = vmatpush1.msra.mxu0 %v1029
      %1140 = vmatprep.subr.mxu0 0.0
      %1141 = vmatpush1.msra.mxu0 %v1030
      %1142 = vmatprep.subr.mxu0 0.0
      %1143 = vmatpush1.msra.mxu0 %v1031
      %1144 = vmatprep.subr.mxu0 0.0
      %1145 = vmatpush1.msra.mxu0 0.0
      %1146 = vmatprep.subr.mxu0 0.0
      %1147 = vmatpush1.msra.mxu0 0.0
      %1148 = vmatprep.subr.mxu0 0.0
      %1149 = vmatpush1.msra.mxu0 0.0
      %1150 = vmatprep.subr.mxu0 0.0
      %1151 = vmatpush1.msra.mxu0 0.0
      %1152 = vmatprep.subr.mxu0 0.0
      %1153 = vmatpush1.msra.mxu0 0.0
      %1154 = vmatprep.subr.mxu0 0.0
      %1155 = vmatpush1.msra.mxu0 0.0
      %1156 = vmatprep.subr.mxu0 0.0
      %1157 = vmatpush1.msra.mxu0 0.0
      %1158 = vmatprep.subr.mxu0 0.0
      %1159 = vmatpush1.msra.mxu0 0.0
      %1160 = vmatprep.subr.mxu0 0.0
      %1161 = vmatpush1.msra.mxu0 0.0
      %1162 = vmatprep.subr.mxu0 0.0
      %1163 = vmatpush1.msra.mxu0 0.0
      %1164 = vmatprep.subr.mxu0 0.0
      %1165 = vmatpush1.msra.mxu0 0.0
      %1166 = vmatprep.subr.mxu0 0.0
      %1167 = vmatpush1.msra.mxu0 0.0
      %1168 = vmatprep.subr.mxu0 0.0
      %1169 = vmatpush1.msra.mxu0 0.0
      %1170 = vmatprep.subr.mxu0 0.0
      %1171 = vmatpush1.msra.mxu0 0.0
      %1172 = vmatprep.subr.mxu0 0.0
      %1173 = vmatpush1.msra.mxu0 0.0
      %1174 = vmatprep.subr.mxu0 0.0
      %1175 = vmatpush1.msra.mxu0 0.0
      %1176 = vmatprep.subr.mxu0 0.0
      %1177 = vmatpush1.msra.mxu0 0.0
      %1178 = vmatprep.subr.mxu0 0.0
      %1179 = vmatpush1.msra.mxu0 0.0
      %1180 = vmatprep.subr.mxu0 0.0
      %1181 = vmatpush1.msra.mxu0 0.0
      %1182 = vmatprep.subr.mxu0 0.0
      %1183 = vmatpush1.msra.mxu0 0.0
      %1184 = vmatprep.subr.mxu0 0.0
      %1185 = vmatpush1.msra.mxu0 0.0
      %1186 = vmatprep.subr.mxu0 0.0
      %1187 = vmatpush1.msra.mxu0 0.0
      %1188 = vmatprep.subr.mxu0 0.0
      %1189 = vmatpush1.msra.mxu0 0.0
      %1190 = vmatprep.subr.mxu0 0.0
      %1191 = vmatpush1.msra.mxu0 0.0
      %1192 = vmatprep.mubr.f32.mxu0 0.0
      %1193 = vmatmul.mubr.f32.gmra.mrb[0].mxu0 %v1033
      %v1194 = vpop.f32.mrb[0].mxu0
      %v1195 = vadd.f32 0.0, %v1194
      %v1196 = vpop.f32.mrb[0].mxu0
      %1197 = vmatprep.mubr.f32.mxu0 0.0
      %1198 = vmatmul.mubr.f32.gmra.mrb[0].mxu0 %v1036
      %v1199 = vpop.f32.mrb[0].mxu0
      %v1200 = vadd.f32 0.0, %v1199
      %v1201 = vpop.f32.mrb[0].mxu0
      %1202 = vmatprep.mubr.f32.mxu0 0.0
      %1203 = vmatmul.mubr.f32.gmra.mrb[0].mxu0 %v1039
      %v1204 = vpop.f32.mrb[0].mxu0
      %v1205 = vadd.f32 0.0, %v1204
      %v1206 = vpop.f32.mrb[0].mxu0
      %1207 = vmatprep.mubr.f32.mxu0 0.0
      %1208 = vmatmul.mubr.f32.gmra.mrb[0].mxu0 %v1042
      %v1209 = vpop.f32.mrb[0].mxu0
      %v1210 = vadd.f32 0.0, %v1209
      %v1211 = vpop.f32.mrb[0].mxu0
      %1212 = vmatprep.mubr.f32.mxu0 0.0
      %1213 = vmatmul.mubr.f32.gmra.mrb[0].mxu0 %v1045
      %v1214 = vpop.f32.mrb[0].mxu0
      %v1215 = vadd.f32 0.0, %v1214
      %v1216 = vpop.f32.mrb[0].mxu0
      %1217 = vmatprep.mubr.f32.mxu0 0.0
      %1218 = vmatmul.mubr.f32.gmra.mrb[0].mxu0 %v1048
      %v1219 = vpop.f32.mrb[0].mxu0
      %v1220 = vadd.f32 0.0, %v1219
      %v1221 = vpop.f32.mrb[0].mxu0
      %1222 = vmatprep.mubr.f32.mxu0 0.0
      %1223 = vmatmul.mubr.f32.gmra.mrb[0].mxu0 %v1051
      %v1224 = vpop.f32.mrb[0].mxu0
      %v1225 = vadd.f32 0.0, %v1224
      %v1226 = vpop.f32.mrb[0].mxu0
      %1227 = vmatprep.mubr.f32.mxu0 0.0
      %1228 = vmatmul.mubr.f32.gmra.mrb[0].mxu0 %v1054
      %v1229 = vpop.f32.mrb[0].mxu0
      %v1230 = vadd.f32 0.0, %v1229
      %v1231 = vpop.f32.mrb[0].mxu0
      %1232 = vmatprep.mubr.f32.mxu0 0.0
      %1233 = vmatmul.mubr.f32.gmra.mrb[0].mxu0 %v1057
      %v1234 = vpop.f32.mrb[0].mxu0
      %v1235 = vadd.f32 0.0, %v1234
      %v1236 = vpop.f32.mrb[0].mxu0
      %1237 = vmatprep.mubr.f32.mxu0 0.0
      %1238 = vmatmul.mubr.f32.gmra.mrb[0].mxu0 %v1060
      %v1239 = vpop.f32.mrb[0].mxu0
      %v1240 = vadd.f32 0.0, %v1239
      %v1241 = vpop.f32.mrb[0].mxu0
      %1242 = vmatprep.mubr.f32.mxu0 0.0
      %1243 = vmatmul.mubr.f32.gmra.mrb[0].mxu0 %v1063
      %v1244 = vpop.f32.mrb[0].mxu0
      %v1245 = vadd.f32 0.0, %v1244
      %v1246 = vpop.f32.mrb[0].mxu0
      %1247 = vmatprep.mubr.f32.mxu0 0.0
      %1248 = vmatmul.mubr.f32.gmra.mrb[0].mxu0 %v1066
      %v1249 = vpop.f32.mrb[0].mxu0
      %v1250 = vadd.f32 0.0, %v1249
      %v1251 = vpop.f32.mrb[0].mxu0
      %1252 = vmatprep.mubr.f32.mxu0 0.0
      %1253 = vmatmul.mubr.f32.gmra.mrb[0].mxu0 %v1069
      %v1254 = vpop.f32.mrb[0].mxu0
      %v1255 = vadd.f32 0.0, %v1254
      %v1256 = vpop.f32.mrb[0].mxu0
      %1257 = vmatprep.mubr.f32.mxu0 0.0
      %1258 = vmatmul.mubr.f32.gmra.mrb[0].mxu0 %v1072
      %v1259 = vpop.f32.mrb[0].mxu0
      %v1260 = vadd.f32 0.0, %v1259
      %v1261 = vpop.f32.mrb[0].mxu0
      %1262 = vmatprep.mubr.f32.mxu0 0.0
      %1263 = vmatmul.mubr.f32.gmra.mrb[0].mxu0 %v1075
      %v1264 = vpop.f32.mrb[0].mxu0
      %v1265 = vadd.f32 0.0, %v1264
      %v1266 = vpop.f32.mrb[0].mxu0
      %1267 = vmatprep.mubr.f32.mxu0 0.0
      %1268 = vmatmul.mubr.f32.gmra.mrb[0].mxu0 %v1078
      %v1269 = vpop.f32.mrb[0].mxu0
      %v1270 = vadd.f32 0.0, %v1269
      %v1271 = vpop.f32.mrb[0].mxu0
      %1272 = vmatprep.mubr.f32.mxu0 0.0
      %1273 = vmatmul.mubr.f32.gmra.mrb[0].mxu0 %v1081
      %v1274 = vpop.f32.mrb[0].mxu0
      %v1275 = vadd.f32 0.0, %v1274
      %v1276 = vpop.f32.mrb[0].mxu0
      %1277 = vmatprep.mubr.f32.mxu0 0.0
      %1278 = vmatmul.mubr.f32.gmra.mrb[0].mxu0 %v1084
      %v1279 = vpop.f32.mrb[0].mxu0
      %v1280 = vadd.f32 0.0, %v1279
      %v1281 = vpop.f32.mrb[0].mxu0
      %1282 = vmatprep.mubr.f32.mxu0 0.0
      %1283 = vmatmul.mubr.f32.gmra.mrb[0].mxu0 %v1087
      %v1284 = vpop.f32.mrb[0].mxu0
      %v1285 = vadd.f32 0.0, %v1284
      %v1286 = vpop.f32.mrb[0].mxu0
      %1287 = vmatprep.mubr.f32.mxu0 0.0
      %1288 = vmatmul.mubr.f32.gmra.mrb[0].mxu0 %v1090
      %v1289 = vpop.f32.mrb[0].mxu0
      %v1290 = vadd.f32 0.0, %v1289
      %v1291 = vpop.f32.mrb[0].mxu0
      %1292 = vmatprep.mubr.f32.mxu0 0.0
      %1293 = vmatmul.mubr.f32.gmra.mrb[0].mxu0 %v1093
      %v1294 = vpop.f32.mrb[0].mxu0
      %v1295 = vadd.f32 0.0, %v1294
      %v1296 = vpop.f32.mrb[0].mxu0
      %1297 = vmatprep.mubr.f32.mxu0 0.0
      %1298 = vmatmul.mubr.f32.gmra.mrb[0].mxu0 %v1096
      %v1299 = vpop.f32.mrb[0].mxu0
      %v1300 = vadd.f32 0.0, %v1299
      %v1301 = vpop.f32.mrb[0].mxu0
      %1302 = vmatprep.mubr.f32.mxu0 0.0
      %1303 = vmatmul.mubr.f32.gmra.mrb[0].mxu0 %v1099
      %v1304 = vpop.f32.mrb[0].mxu0
      %v1305 = vadd.f32 0.0, %v1304
      %v1306 = vpop.f32.mrb[0].mxu0
      %1307 = vmatprep.mubr.f32.mxu0 0.0
      %1308 = vmatmul.mubr.f32.gmra.mrb[0].mxu0 %v1102
      %v1309 = vpop.f32.mrb[0].mxu0
      %v1310 = vadd.f32 0.0, %v1309
      %v1311 = vpop.f32.mrb[0].mxu0
      %1312 = vmatprep.mubr.f32.mxu0 0.0
      %1313 = vmatmul.mubr.f32.gmra.mrb[0].mxu0 %v1105
      %v1314 = vpop.f32.mrb[0].mxu0
      %v1315 = vadd.f32 0.0, %v1314
      %v1316 = vpop.f32.mrb[0].mxu0
      %1317 = vmatprep.mubr.f32.mxu0 0.0
      %1318 = vmatmul.mubr.f32.gmra.mrb[0].mxu0 %v1108
      %v1319 = vpop.f32.mrb[0].mxu0
      %v1320 = vadd.f32 0.0, %v1319
      %v1321 = vpop.f32.mrb[0].mxu0
      %1322 = vmatprep.mubr.f32.mxu0 0.0
      %1323 = vmatmul.mubr.f32.gmra.mrb[0].mxu0 %v1111
      %v1324 = vpop.f32.mrb[0].mxu0
      %v1325 = vadd.f32 0.0, %v1324
      %v1326 = vpop.f32.mrb[0].mxu0
      %1327 = vmatprep.mubr.f32.mxu0 0.0
      %1328 = vmatmul.mubr.f32.gmra.mrb[0].mxu0 %v1114
      %v1329 = vpop.f32.mrb[0].mxu0
      %v1330 = vadd.f32 0.0, %v1329
      %v1331 = vpop.f32.mrb[0].mxu0
      %1332 = vmatprep.mubr.f32.mxu0 0.0
      %1333 = vmatmul.mubr.f32.gmra.mrb[0].mxu0 %v1117
      %v1334 = vpop.f32.mrb[0].mxu0
      %v1335 = vadd.f32 0.0, %v1334
      %v1336 = vpop.f32.mrb[0].mxu0
      %1337 = vmatprep.mubr.f32.mxu0 0.0
      %1338 = vmatmul.mubr.f32.gmra.mrb[0].mxu0 %v1120
      %v1339 = vpop.f32.mrb[0].mxu0
      %v1340 = vadd.f32 0.0, %v1339
      %v1341 = vpop.f32.mrb[0].mxu0
      %1342 = vmatprep.mubr.f32.mxu0 0.0
      %1343 = vmatmul.mubr.f32.gmra.mrb[0].mxu0 %v1123
      %v1344 = vpop.f32.mrb[0].mxu0
      %v1345 = vadd.f32 0.0, %v1344
      %v1346 = vpop.f32.mrb[0].mxu0
      %1347 = vmatprep.mubr.f32.mxu0 0.0
      %1348 = vmatmul.mubr.f32.gmra.mrb[0].mxu0 %v1126
      %v1349 = vpop.f32.mrb[0].mxu0
      %v1350 = vadd.f32 0.0, %v1349
      %v1351 = vpop.f32.mrb[0].mxu0
      %1352 = vdwg.mxu0
      %v1353 = vxor.u32 %v1195, 2147483648
      %v1354 = vxor.u32 %v1200, 2147483648
      %v1355 = vxor.u32 %v1205, 2147483648
      %v1356 = vxor.u32 %v1210, 2147483648
      %v1357 = vxor.u32 %v1215, 2147483648
      %v1358 = vxor.u32 %v1220, 2147483648
      %v1359 = vxor.u32 %v1225, 2147483648
      %v1360 = vxor.u32 %v1230, 2147483648
      %v1361 = vxor.u32 %v1235, 2147483648
      %v1362 = vxor.u32 %v1240, 2147483648
      %v1363 = vxor.u32 %v1245, 2147483648
      %v1364 = vxor.u32 %v1250, 2147483648
      %v1365 = vxor.u32 %v1255, 2147483648
      %v1366 = vxor.u32 %v1260, 2147483648
      %v1367 = vxor.u32 %v1265, 2147483648
      %v1368 = vxor.u32 %v1270, 2147483648
      %v1369 = vxor.u32 %v1275, 2147483648
      %v1370 = vxor.u32 %v1280, 2147483648
      %v1371 = vxor.u32 %v1285, 2147483648
      %v1372 = vxor.u32 %v1290, 2147483648
      %v1373 = vxor.u32 %v1295, 2147483648
      %v1374 = vxor.u32 %v1300, 2147483648
      %v1375 = vxor.u32 %v1305, 2147483648
      %v1376 = vxor.u32 %v1310, 2147483648
      %v1377 = vxor.u32 %v1315, 2147483648
      %v1378 = vxor.u32 %v1320, 2147483648
      %v1379 = vxor.u32 %v1325, 2147483648
      %v1380 = vxor.u32 %v1330, 2147483648
      %v1381 = vxor.u32 %v1335, 2147483648
      %v1382 = vxor.u32 %v1340, 2147483648
      %v1383 = vxor.u32 %v1345, 2147483648
      %v1384 = vxor.u32 %v1350, 2147483648
      %v1385 = vmul.f32 %v1353, 1.442695
      %v1386 = vpow.pop %v1385
      %v1387 = vmul.f32 %v1354, 1.442695
      %v1388 = vpow.pop %v1387
      %v1389 = vmul.f32 %v1355, 1.442695
      %v1390 = vpow.pop %v1389
      %v1391 = vmul.f32 %v1356, 1.442695
      %v1392 = vpow.pop %v1391
      %v1393 = vmul.f32 %v1357, 1.442695
      %v1394 = vpow.pop %v1393
      %v1395 = vmul.f32 %v1358, 1.442695
      %v1396 = vpow.pop %v1395
      %v1397 = vmul.f32 %v1359, 1.442695
      %v1398 = vpow.pop %v1397
      %v1399 = vmul.f32 %v1360, 1.442695
      %v1400 = vpow.pop %v1399
      %v1401 = vmul.f32 %v1361, 1.442695
      %v1402 = vpow.pop %v1401
      %v1403 = vmul.f32 %v1362, 1.442695
      %v1404 = vpow.pop %v1403
      %v1405 = vmul.f32 %v1363, 1.442695
      %v1406 = vpow.pop %v1405
      %v1407 = vmul.f32 %v1364, 1.442695
      %v1408 = vpow.pop %v1407
      %v1409 = vmul.f32 %v1365, 1.442695
      %v1410 = vpow.pop %v1409
      %v1411 = vmul.f32 %v1366, 1.442695
      %v1412 = vpow.pop %v1411
      %v1413 = vmul.f32 %v1367, 1.442695
      %v1414 = vpow.pop %v1413
      %v1415 = vmul.f32 %v1368, 1.442695
      %v1416 = vpow.pop %v1415
      %v1417 = vmul.f32 %v1369, 1.442695
      %v1418 = vpow.pop %v1417
      %v1419 = vmul.f32 %v1370, 1.442695
      %v1420 = vpow.pop %v1419
      %v1421 = vmul.f32 %v1371, 1.442695
      %v1422 = vpow.pop %v1421
      %v1423 = vmul.f32 %v1372, 1.442695
      %v1424 = vpow.pop %v1423
      %v1425 = vmul.f32 %v1373, 1.442695
      %v1426 = vpow.pop %v1425
      %v1427 = vmul.f32 %v1374, 1.442695
      %v1428 = vpow.pop %v1427
      %v1429 = vmul.f32 %v1375, 1.442695
      %v1430 = vpow.pop %v1429
      %v1431 = vmul.f32 %v1376, 1.442695
      %v1432 = vpow.pop %v1431
      %v1433 = vmul.f32 %v1377, 1.442695
      %v1434 = vpow.pop %v1433
      %v1435 = vmul.f32 %v1378, 1.442695
      %v1436 = vpow.pop %v1435
      %v1437 = vmul.f32 %v1379, 1.442695
      %v1438 = vpow.pop %v1437
      %v1439 = vmul.f32 %v1380, 1.442695
      %v1440 = vpow.pop %v1439
      %v1441 = vmul.f32 %v1381, 1.442695
      %v1442 = vpow.pop %v1441
      %v1443 = vmul.f32 %v1382, 1.442695
      %v1444 = vpow.pop %v1443
      %v1445 = vmul.f32 %v1383, 1.442695
      %v1446 = vpow.pop %v1445
      %v1447 = vmul.f32 %v1384, 1.442695
      %v1448 = vpow.pop %v1447
      %v1449 = vadd.f32 %v1386, 1.0
      %v1450 = vadd.f32 %v1388, 1.0
      %v1451 = vadd.f32 %v1390, 1.0
      %v1452 = vadd.f32 %v1392, 1.0
      %v1453 = vadd.f32 %v1394, 1.0
      %v1454 = vadd.f32 %v1396, 1.0
      %v1455 = vadd.f32 %v1398, 1.0
      %v1456 = vadd.f32 %v1400, 1.0
      %v1457 = vadd.f32 %v1402, 1.0
      %v1458 = vadd.f32 %v1404, 1.0
      %v1459 = vadd.f32 %v1406, 1.0
      %v1460 = vadd.f32 %v1408, 1.0
      %v1461 = vadd.f32 %v1410, 1.0
      %v1462 = vadd.f32 %v1412, 1.0
      %v1463 = vadd.f32 %v1414, 1.0
      %v1464 = vadd.f32 %v1416, 1.0
      %v1465 = vadd.f32 %v1418, 1.0
      %v1466 = vadd.f32 %v1420, 1.0
      %v1467 = vadd.f32 %v1422, 1.0
      %v1468 = vadd.f32 %v1424, 1.0
      %v1469 = vadd.f32 %v1426, 1.0
      %v1470 = vadd.f32 %v1428, 1.0
      %v1471 = vadd.f32 %v1430, 1.0
      %v1472 = vadd.f32 %v1432, 1.0
      %v1473 = vadd.f32 %v1434, 1.0
      %v1474 = vadd.f32 %v1436, 1.0
      %v1475 = vadd.f32 %v1438, 1.0
      %v1476 = vadd.f32 %v1440, 1.0
      %v1477 = vadd.f32 %v1442, 1.0
      %v1478 = vadd.f32 %v1444, 1.0
      %v1479 = vadd.f32 %v1446, 1.0
      %v1480 = vadd.f32 %v1448, 1.0
      %v1481 = vrcp.pop %v1449
      %v1482 = vmul.f32 1.0, %v1481
      %v1483 = vrcp.pop %v1450
      %v1484 = vmul.f32 1.0, %v1483
      %v1485 = vrcp.pop %v1451
      %v1486 = vmul.f32 1.0, %v1485
      %v1487 = vrcp.pop %v1452
      %v1488 = vmul.f32 1.0, %v1487
      %v1489 = vrcp.pop %v1453
      %v1490 = vmul.f32 1.0, %v1489
      %v1491 = vrcp.pop %v1454
      %v1492 = vmul.f32 1.0, %v1491
      %v1493 = vrcp.pop %v1455
      %v1494 = vmul.f32 1.0, %v1493
      %v1495 = vrcp.pop %v1456
      %v1496 = vmul.f32 1.0, %v1495
      %v1497 = vrcp.pop %v1457
      %v1498 = vmul.f32 1.0, %v1497
      %v1499 = vrcp.pop %v1458
      %v1500 = vmul.f32 1.0, %v1499
      %v1501 = vrcp.pop %v1459
      %v1502 = vmul.f32 1.0, %v1501
      %v1503 = vrcp.pop %v1460
      %v1504 = vmul.f32 1.0, %v1503
      %v1505 = vrcp.pop %v1461
      %v1506 = vmul.f32 1.0, %v1505
      %v1507 = vrcp.pop %v1462
      %v1508 = vmul.f32 1.0, %v1507
      %v1509 = vrcp.pop %v1463
      %v1510 = vmul.f32 1.0, %v1509
      %v1511 = vrcp.pop %v1464
      %v1512 = vmul.f32 1.0, %v1511
      %v1513 = vrcp.pop %v1465
      %v1514 = vmul.f32 1.0, %v1513
      %v1515 = vrcp.pop %v1466
      %v1516 = vmul.f32 1.0, %v1515
      %v1517 = vrcp.pop %v1467
      %v1518 = vmul.f32 1.0, %v1517
      %v1519 = vrcp.pop %v1468
      %v1520 = vmul.f32 1.0, %v1519
      %v1521 = vrcp.pop %v1469
      %v1522 = vmul.f32 1.0, %v1521
      %v1523 = vrcp.pop %v1470
      %v1524 = vmul.f32 1.0, %v1523
      %v1525 = vrcp.pop %v1471
      %v1526 = vmul.f32 1.0, %v1525
      %v1527 = vrcp.pop %v1472
      %v1528 = vmul.f32 1.0, %v1527
      %v1529 = vrcp.pop %v1473
      %v1530 = vmul.f32 1.0, %v1529
      %v1531 = vrcp.pop %v1474
      %v1532 = vmul.f32 1.0, %v1531
      %v1533 = vrcp.pop %v1475
      %v1534 = vmul.f32 1.0, %v1533
      %v1535 = vrcp.pop %v1476
      %v1536 = vmul.f32 1.0, %v1535
      %v1537 = vrcp.pop %v1477
      %v1538 = vmul.f32 1.0, %v1537
      %v1539 = vrcp.pop %v1478
      %v1540 = vmul.f32 1.0, %v1539
      %v1541 = vrcp.pop %v1479
      %v1542 = vmul.f32 1.0, %v1541
      %v1543 = vrcp.pop %v1480
      %v1544 = vmul.f32 1.0, %v1543
      %vm1545 = vcmask 7168
      %1546 = vst.msk [vmem:[%s253] sm:$0xff] %vm1545, %v1482
      %1547 = vst.msk [vmem:[%s253 + $0x8] sm:$0xff] %vm1545, %v1484
      %1548 = vst.msk [vmem:[%s253 + $0x10] sm:$0xff] %vm1545, %v1486
      %1549 = vst.msk [vmem:[%s253 + $0x18] sm:$0xff] %vm1545, %v1488
      %1550 = vst.msk [vmem:[%s253 + $0x20] sm:$0xff] %vm1545, %v1490
      %1551 = vst.msk [vmem:[%s253 + $0x28] sm:$0xff] %vm1545, %v1492
      %1552 = vst.msk [vmem:[%s253 + $0x30] sm:$0xff] %vm1545, %v1494
      %1553 = vst.msk [vmem:[%s253 + $0x38] sm:$0xff] %vm1545, %v1496
      %1554 = vst.msk [vmem:[%s253 + $0x40] sm:$0xff] %vm1545, %v1498
      %1555 = vst.msk [vmem:[%s253 + $0x48] sm:$0xff] %vm1545, %v1500
      %1556 = vst.msk [vmem:[%s253 + $0x50] sm:$0xff] %vm1545, %v1502
      %1557 = vst.msk [vmem:[%s253 + $0x58] sm:$0xff] %vm1545, %v1504
      %1558 = vst.msk [vmem:[%s253 + $0x60] sm:$0xff] %vm1545, %v1506
      %1559 = vst.msk [vmem:[%s253 + $0x68] sm:$0xff] %vm1545, %v1508
      %1560 = vst.msk [vmem:[%s253 + $0x70] sm:$0xff] %vm1545, %v1510
      %1561 = vst.msk [vmem:[%s253 + $0x78] sm:$0xff] %vm1545, %v1512
      %1562 = vst.msk [vmem:[%s253 + $0x80] sm:$0xff] %vm1545, %v1514
      %1563 = vst.msk [vmem:[%s253 + $0x88] sm:$0xff] %vm1545, %v1516
      %1564 = vst.msk [vmem:[%s253 + $0x90] sm:$0xff] %vm1545, %v1518
      %1565 = vst.msk [vmem:[%s253 + $0x98] sm:$0xff] %vm1545, %v1520
      %1566 = vst.msk [vmem:[%s253 + $0xa0] sm:$0xff] %vm1545, %v1522
      %1567 = vst.msk [vmem:[%s253 + $0xa8] sm:$0xff] %vm1545, %v1524
      %1568 = vst.msk [vmem:[%s253 + $0xb0] sm:$0xff] %vm1545, %v1526
      %1569 = vst.msk [vmem:[%s253 + $0xb8] sm:$0xff] %vm1545, %v1528
      %1570 = vst.msk [vmem:[%s253 + $0xc0] sm:$0xff] %vm1545, %v1530
      %1571 = vst.msk [vmem:[%s253 + $0xc8] sm:$0xff] %vm1545, %v1532
      %1572 = vst.msk [vmem:[%s253 + $0xd0] sm:$0xff] %vm1545, %v1534
      %1573 = vst.msk [vmem:[%s253 + $0xd8] sm:$0xff] %vm1545, %v1536
      %1574 = vst.msk [vmem:[%s253 + $0xe0] sm:$0xff] %vm1545, %v1538
      %1575 = vst.msk [vmem:[%s253 + $0xe8] sm:$0xff] %vm1545, %v1540
      %1576 = vst.msk [vmem:[%s253 + $0xf0] sm:$0xff] %vm1545, %v1542
      %1577 = vst.msk [vmem:[%s253 + $0xf8] sm:$0xff] %vm1545, %v1544
      %s1578 = smul.u32 32, %s17
      %p1579 = scmp.lt.s32.totalorder %s1578, 63
      %s1580 = scalar_select %p1579, %s1578, 63
      %s1581 = smul.addr %s1580, 8
      %s1582 = scalar_lea.vmem %s6, %s1581
      // Predicated region
      $region45: #{mlp_head_forward.1} parent=43 // pred_check
        %p1583 = pneg %p166
      $region46: #{mlp_head_forward.1} parent=43 // pred_check_branch
        %1585 = sbr.rel (%p1583) target = $region48
      $region47: #{mlp_head_forward.1} parent=43 // pred_region
        %s1586 = smul.u32 32, %s17
      $region48: #{mlp_head_forward.1} parent=43 // pred_fallthru
        _
    $region44: #{mlp_head_forward.1} parent=5 // pred_fallthru
      _
    %p1587 = scmp.le.s32.totalorder 2, %s12
    // Predicated region
    $region49: #{mlp_head_forward.1} parent=5 // pred_check
      %p1588 = pneg %p1587
    $region50: #{mlp_head_forward.1} parent=5 // pred_check_branch
      %1590 = sbr.rel (%p1588) target = $region52
    $region51: #{mlp_head_forward.1} parent=5 // pred_region
      %s1591 = ssub.s32 %s12, 2
      // Predicated region
      $region53: #{mlp_head_forward.1} parent=51 // pred_check
        %p1592 = pneg %p172
      $region54: #{mlp_head_forward.1} parent=51 // pred_check_branch
        %1594 = sbr.rel (%p1592) target = $region56
      $region55: #{mlp_head_forward.1} parent=51 // pred_region
        %s1595 = smul.u32 32, %s18
        %p1596 = scmp.lt.s32.totalorder %s1595, 63
        %s1597 = scalar_select %p1596, %s1595, 63
        %s1598 = smul.addr %s1597, 8
        %s1599 = scalar_lea.vmem %s6, %s1598
      $region56: #{mlp_head_forward.1} parent=51 // pred_fallthru
        _
    $region52: #{mlp_head_forward.1} parent=5 // pred_fallthru
      _
  $region6: #{mlp_head_forward.1} parent=0 // loop_footer
    %s16 = sadd.s32 1, %s12
  $region7: #{mlp_head_forward.1} parent=0 // loop_footer_branch
    %11 = sbr.rel target = $region3
  $region8: #{mlp_head_forward.1} parent=0 // loop_exit
    _

</llo_original>
